<compile_context>
chip_gen: v6e
topology: v6e:2x2x1
jax: 0.10.0
libtpu: 0.0.40
codegen_flags: <defaults>
</compile_context>

<pallas_src>
from functools import partial

import jax
import jax.numpy as jnp
from jax.experimental import pallas as pl
from jax.experimental.pallas import tpu as pltpu


def _round_up(n, m):
    return ((n + m - 1) // m) * m


def _fused_pinn_kernel(t_ref, x_ref, *refs,
                       n_state_layers, n_mode_layers,
                       n_t_tiles, n_x_tiles, n_grid):
    """Fused kernel: net_state on t and net_mode on x for one lane-dense tile.

    refs layout:
      state W (out,in) x n_state_layers, state b (out,1) x n_state_layers,
      mode  W (out,in) x n_mode_layers,  mode  b (out,1) x n_mode_layers,
      tau_out (out_state, TM), phi_out (out_mode, TM)
    """
    ns, nm = n_state_layers, n_mode_layers
    s_w = refs[0:ns]
    s_b = refs[ns:2 * ns]
    m_w = refs[2 * ns:2 * ns + nm]
    m_b = refs[2 * ns + nm:2 * ns + 2 * nm]
    tau_ref = refs[2 * ns + 2 * nm]
    phi_ref = refs[2 * ns + 2 * nm + 1]

    def run_mlp(x_row, w_refs, b_refs):
        # First layer has contraction K=1: do it on the VPU as a
        # sublane-broadcast FMA ((H,1)*(1,TM)+(H,1)) instead of an MXU
        # push/pop round trip; vregs stay fully lane-packed.
        h = jnp.tanh(w_refs[0][...] * x_row + b_refs[0][...])          # (H, TM)
        n_layers = len(w_refs)
        for li in range(1, n_layers):
            w = w_refs[li][...]                                        # (out, in)
            b = b_refs[li][...]                                        # (out, 1)
            h = jnp.dot(w, h, preferred_element_type=jnp.float32) + b  # (out, TM)
            if li < n_layers - 1:
                h = jnp.tanh(h)
        return h

    def state_body():
        tau_ref[...] = run_mlp(t_ref[...], s_w, s_b)

    def mode_body():
        phi_ref[...] = run_mlp(x_ref[...], m_w, m_b)

    # Skip the shorter net's compute on tiles that are pure padding.
    # Tile counts are static Python ints, so the guard disappears entirely
    # when every tile has real rows for that net.
    if n_t_tiles >= n_grid:
        state_body()
    else:
        pl.when(pl.program_id(0) < n_t_tiles)(state_body)
    if n_x_tiles >= n_grid:
        mode_body()
    else:
        pl.when(pl.program_id(0) < n_x_tiles)(mode_body)


def beam_sep_ss_pinn_forward(t_span, x_span, state_params, mode_params,
                             *, block_rows=2048):
    """Equivalent of beam_sep_ss_pinn.forward -> (tau_pred, phi_pred).

    t_span : (N_t, 1) float32
    x_span : (N_x, 1) float32
    *_params: (list_of_weights (in,out), list_of_biases (out,))
    """
    state_w, state_b = state_params
    mode_w, mode_b = mode_params

    n_t = int(t_span.shape[0])
    n_x = int(x_span.shape[0])
    out_state = int(state_w[-1].shape[1])   # 2 * n_modes
    out_mode = int(mode_w[-1].shape[1])     # n_modes

    # --- row tiling (sample axis on lanes -> tiles are multiples of 128) ---
    n_max = max(n_t, n_x)
    n_ceil = _round_up(max(n_max, 1), 128)
    tm = min(_round_up(block_rows, 128), n_ceil)
    # v7x megacore: keep at least ~4 tiles when there is enough work so both
    # TensorCores get fed via the "parallel" row axis (neutral on v5e/v6e).
    if n_ceil >= 4 * 128 and n_ceil // tm < 4:
        tm = max(128, _round_up(pl.cdiv(n_ceil, 4), 128))
    n_pad = _round_up(n_max, tm)
    n_grid = n_pad // tm
    n_t_tiles = pl.cdiv(n_t, tm)
    n_x_tiles = pl.cdiv(n_x, tm)

    # Lane-dense inputs: (N,1) -> (1, N_pad) row vectors.
    t_row = jnp.pad(t_span.astype(jnp.float32).reshape(1, -1),
                    ((0, 0), (0, n_pad - n_t)))
    x_row = jnp.pad(x_span.astype(jnp.float32).reshape(1, -1),
                    ((0, 0), (0, n_pad - n_x)))

    # Weights as (out, in); biases as (out, 1) columns (broadcast along lanes).
    def pack(ws, bs):
        W = [w.astype(jnp.float32).T for w in ws]
        B = [b.astype(jnp.float32).reshape(-1, 1) for b in bs]
        return W, B

    sW, sB = pack(state_w, state_b)
    mW, mB = pack(mode_w, mode_b)

    def row_spec(feat):
        return pl.BlockSpec((feat, tm), lambda i: (0, i))

    def full_spec(arr):
        # Full-array resident block (constant index map across the row grid).
        return pl.BlockSpec(arr.shape, lambda i: (0, 0))

    in_specs = ([row_spec(1), row_spec(1)]
                + [full_spec(w) for w in sW] + [full_spec(b) for b in sB]
                + [full_spec(w) for w in mW] + [full_spec(b) for b in mB])
    out_specs = (row_spec(out_state), row_spec(out_mode))

    kernel = partial(_fused_pinn_kernel,
                     n_state_layers=len(sW), n_mode_layers=len(mW),
                     n_t_tiles=n_t_tiles, n_x_tiles=n_x_tiles, n_grid=n_grid)

    tau_pad, phi_pad = pl.pallas_call(
        kernel,
        grid=(n_grid,),
        in_specs=in_specs,
        out_specs=out_specs,
        out_shape=(jax.ShapeDtypeStruct((out_state, n_pad), jnp.float32),
                   jax.ShapeDtypeStruct((out_mode, n_pad), jnp.float32)),
        compiler_params=pltpu.CompilerParams(
            dimension_semantics=("parallel",)),
    )(t_row, x_row, *sW, *sB, *mW, *mB)

    # Back to the module's (N, features) convention.
    return tau_pad[:, :n_t].T, phi_pad[:, :n_x].T


def _init_linear(key, n_in, n_out):
    """Deterministic init matching PyTorch nn.Linear default (uniform +-1/sqrt(in))."""
    kw, kb = jax.random.split(key)
    bound = 1.0 / float(n_in) ** 0.5
    w = jax.random.uniform(kw, (n_in, n_out), jnp.float32, -bound, bound)
    b = jax.random.uniform(kb, (n_out,), jnp.float32, -bound, bound)
    return w, b


def build_params(key, n_modes, n_hidden_state, n_layers_state):
    """Build both nets' parameter lists (weights stored as (in, out))."""
    n_input = 1
    n_output_state = 2 * n_modes
    n_hidden_mode = 2 * n_modes
    n_layers_mode = 2
    n_output_mode = n_modes

    state_dims = [n_input] + [n_hidden_state] * n_layers_state + [n_output_state]
    mode_dims = [n_input] + [n_hidden_mode] * n_layers_mode + [n_output_mode]

    keys = jax.random.split(key, len(state_dims) - 1 + len(mode_dims) - 1)
    k_idx = 0

    state_w, state_b = [], []
    for din, dout in zip(state_dims[:-1], state_dims[1:]):
        w, b = _init_linear(keys[k_idx], din, dout)
        k_idx += 1
        state_w.append(w)
        state_b.append(b)

    mode_w, mode_b = [], []
    for din, dout in zip(mode_dims[:-1], mode_dims[1:]):
        w, b = _init_linear(keys[k_idx], din, dout)
        k_idx += 1
        mode_w.append(w)
        mode_b.append(b)

    return (state_w, state_b), (mode_w, mode_b)


def _reference_forward(t_span, x_span, state_params, mode_params):
    """Plain-JAX reference for correctness checking (untransposed layout)."""
    def run(x, ws, bs):
        h = x
        for i, (w, b) in enumerate(zip(ws, bs)):
            h = h @ w + b
            if i < len(ws) - 1:
                h = jnp.tanh(h)
        return h
    sw, sb = state_params
    mw, mb = mode_params
    return run(t_span, sw, sb), run(x_span, mw, mb)


if __name__ == "__main__":
    # config analogous to the PyTorch module's __init__
    n_modes = 4
    n_hidden = 32
    n_layers = 3

    key = jax.random.PRNGKey(0)
    k_params, k_t, k_x = jax.random.split(key, 3)

    state_params, mode_params = build_params(k_params, n_modes, n_hidden, n_layers)

    # Different sample counts exercise the shared-grid padding, the multi-tile
    # row grid, and the pl.when skip of padding-only tiles for the shorter net.
    n_t, n_x = 40, 600
    t_span = jax.random.uniform(k_t, (n_t, 1), jnp.float32)
    x_span = jax.random.uniform(k_x, (n_x, 1), jnp.float32)

    tau_pred, phi_pred = beam_sep_ss_pinn_forward(
        t_span, x_span, state_params, mode_params)
    tau_pred = jax.block_until_ready(tau_pred)
    phi_pred = jax.block_until_ready(phi_pred)

    # sanity check against plain-JAX reference
    tau_ref, phi_ref = _reference_forward(t_span, x_span, state_params, mode_params)
    assert tau_pred.shape == (n_t, 2 * n_modes)
    assert phi_pred.shape == (n_x, n_modes)
    # Tolerance covers MXU default-precision matmul noise; structural bugs
    # (wrong bias/slice/transpose) would be O(0.1) and still get caught.
    assert jnp.allclose(tau_pred, tau_ref, atol=5e-4, rtol=5e-4), "tau mismatch"
    assert jnp.allclose(phi_pred, phi_ref, atol=5e-4, rtol=5e-4), "phi mismatch"

    print("KERNEL_OK")
</pallas_src>

<mosaic_0001>
module attributes {stable_mosaic.version = 11 : i64} {
  func.func @_fused_pinn_kernel(%arg0: i32, %arg1: memref<1x256xf32, #tpu.memory_space<vmem>>, %arg2: memref<1x256xf32, #tpu.memory_space<vmem>>, %arg3: memref<32x1xf32, #tpu.memory_space<vmem>>, %arg4: memref<32x32xf32, #tpu.memory_space<vmem>>, %arg5: memref<32x32xf32, #tpu.memory_space<vmem>>, %arg6: memref<8x32xf32, #tpu.memory_space<vmem>>, %arg7: memref<32x1xf32, #tpu.memory_space<vmem>>, %arg8: memref<32x1xf32, #tpu.memory_space<vmem>>, %arg9: memref<32x1xf32, #tpu.memory_space<vmem>>, %arg10: memref<8x1xf32, #tpu.memory_space<vmem>>, %arg11: memref<8x1xf32, #tpu.memory_space<vmem>>, %arg12: memref<8x8xf32, #tpu.memory_space<vmem>>, %arg13: memref<4x8xf32, #tpu.memory_space<vmem>>, %arg14: memref<8x1xf32, #tpu.memory_space<vmem>>, %arg15: memref<8x1xf32, #tpu.memory_space<vmem>>, %arg16: memref<4x1xf32, #tpu.memory_space<vmem>>, %arg17: memref<8x256xf32, #tpu.memory_space<vmem>>, %arg18: memref<4x256xf32, #tpu.memory_space<vmem>>) attributes {dimension_semantics = [#tpu.dimension_semantics<parallel>], iteration_bounds = array<i64: 3>, scalar_prefetch = 0 : i64, scratch_operands = 0 : i64, tpu.core_type = #tpu.core_type<tc>, window_params = [{transform_indices = @transform_0, window_bounds = array<i64: 1, 256>}, {transform_indices = @transform_1, window_bounds = array<i64: 1, 256>}, {pipeline_mode = #tpu.pipeline_mode<synchronous>, transform_indices = @transform_2, window_bounds = array<i64: 32, 1>}, {pipeline_mode = #tpu.pipeline_mode<synchronous>, transform_indices = @transform_3, window_bounds = array<i64: 32, 32>}, {pipeline_mode = #tpu.pipeline_mode<synchronous>, transform_indices = @transform_4, window_bounds = array<i64: 32, 32>}, {pipeline_mode = #tpu.pipeline_mode<synchronous>, transform_indices = @transform_5, window_bounds = array<i64: 8, 32>}, {pipeline_mode = #tpu.pipeline_mode<synchronous>, transform_indices = @transform_6, window_bounds = array<i64: 32, 1>}, {pipeline_mode = #tpu.pipeline_mode<synchronous>, transform_indices = @transform_7, window_bounds = array<i64: 32, 1>}, {pipeline_mode = #tpu.pipeline_mode<synchronous>, transform_indices = @transform_8, window_bounds = array<i64: 32, 1>}, {pipeline_mode = #tpu.pipeline_mode<synchronous>, transform_indices = @transform_9, window_bounds = array<i64: 8, 1>}, {pipeline_mode = #tpu.pipeline_mode<synchronous>, transform_indices = @transform_10, window_bounds = array<i64: 8, 1>}, {pipeline_mode = #tpu.pipeline_mode<synchronous>, transform_indices = @transform_11, window_bounds = array<i64: 8, 8>}, {pipeline_mode = #tpu.pipeline_mode<synchronous>, transform_indices = @transform_12, window_bounds = array<i64: 4, 8>}, {pipeline_mode = #tpu.pipeline_mode<synchronous>, transform_indices = @transform_13, window_bounds = array<i64: 8, 1>}, {pipeline_mode = #tpu.pipeline_mode<synchronous>, transform_indices = @transform_14, window_bounds = array<i64: 8, 1>}, {pipeline_mode = #tpu.pipeline_mode<synchronous>, transform_indices = @transform_15, window_bounds = array<i64: 4, 1>}, {transform_indices = @transform_16, window_bounds = array<i64: 8, 256>}, {transform_indices = @transform_17, window_bounds = array<i64: 4, 256>}]} {
    %c1_i32 = arith.constant 1 : i32
    %0 = arith.cmpi slt, %arg0, %c1_i32 : i32
    %1 = arith.extui %0 : i1 to i32
    %c0_i32 = arith.constant 0 : i32
    %2 = arith.cmpi ne, %1, %c0_i32 : i32
    scf.if %2 {
      %c0_16 = arith.constant 0 : index
      %c0_17 = arith.constant 0 : index
      %24 = vector.load %arg1[%c0_16, %c0_17] : memref<1x256xf32, #tpu.memory_space<vmem>>, vector<1x256xf32>
      %c0_18 = arith.constant 0 : index
      %c0_19 = arith.constant 0 : index
      %25 = vector.load %arg3[%c0_18, %c0_19] : memref<32x1xf32, #tpu.memory_space<vmem>>, vector<32x1xf32>
      %26 = vector.broadcast %25 : vector<32x1xf32> to vector<32x256xf32>
      %27 = vector.broadcast %24 : vector<1x256xf32> to vector<32x256xf32>
      %28 = arith.mulf %26, %27 : vector<32x256xf32>
      %c0_20 = arith.constant 0 : index
      %c0_21 = arith.constant 0 : index
      %29 = vector.load %arg7[%c0_20, %c0_21] : memref<32x1xf32, #tpu.memory_space<vmem>>, vector<32x1xf32>
      %30 = vector.broadcast %29 : vector<32x1xf32> to vector<32x256xf32>
      %31 = arith.addf %28, %30 : vector<32x256xf32>
      %32 = math.tanh %31 : vector<32x256xf32>
      %c0_22 = arith.constant 0 : index
      %c0_23 = arith.constant 0 : index
      %33 = vector.load %arg4[%c0_22, %c0_23] : memref<32x32xf32, #tpu.memory_space<vmem>>, vector<32x32xf32>
      %c0_24 = arith.constant 0 : index
      %c0_25 = arith.constant 0 : index
      %34 = vector.load %arg8[%c0_24, %c0_25] : memref<32x1xf32, #tpu.memory_space<vmem>>, vector<32x1xf32>
      %cst_26 = arith.constant dense<0.000000e+00> : vector<32x256xf32>
      %35 = tpu.matmul %33, %32, %cst_26 {dimension_numbers = #tpu.dot_dimension_numbers<[1], [0], [0], [1], [0, 0, 1, 1], [], []>} : vector<32x32xf32>, vector<32x256xf32>, vector<32x256xf32> -> vector<32x256xf32>
      %36 = vector.broadcast %34 : vector<32x1xf32> to vector<32x256xf32>
      %37 = arith.addf %35, %36 : vector<32x256xf32>
      %38 = math.tanh %37 : vector<32x256xf32>
      %c0_27 = arith.constant 0 : index
      %c0_28 = arith.constant 0 : index
      %39 = vector.load %arg5[%c0_27, %c0_28] : memref<32x32xf32, #tpu.memory_space<vmem>>, vector<32x32xf32>
      %c0_29 = arith.constant 0 : index
      %c0_30 = arith.constant 0 : index
      %40 = vector.load %arg9[%c0_29, %c0_30] : memref<32x1xf32, #tpu.memory_space<vmem>>, vector<32x1xf32>
      %cst_31 = arith.constant dense<0.000000e+00> : vector<32x256xf32>
      %41 = tpu.matmul %39, %38, %cst_31 {dimension_numbers = #tpu.dot_dimension_numbers<[1], [0], [0], [1], [0, 0, 1, 1], [], []>} : vector<32x32xf32>, vector<32x256xf32>, vector<32x256xf32> -> vector<32x256xf32>
      %42 = vector.broadcast %40 : vector<32x1xf32> to vector<32x256xf32>
      %43 = arith.addf %41, %42 : vector<32x256xf32>
      %44 = math.tanh %43 : vector<32x256xf32>
      %c0_32 = arith.constant 0 : index
      %c0_33 = arith.constant 0 : index
      %45 = vector.load %arg6[%c0_32, %c0_33] : memref<8x32xf32, #tpu.memory_space<vmem>>, vector<8x32xf32>
      %c0_34 = arith.constant 0 : index
      %c0_35 = arith.constant 0 : index
      %46 = vector.load %arg10[%c0_34, %c0_35] : memref<8x1xf32, #tpu.memory_space<vmem>>, vector<8x1xf32>
      %cst_36 = arith.constant dense<0.000000e+00> : vector<8x256xf32>
      %47 = tpu.matmul %45, %44, %cst_36 {dimension_numbers = #tpu.dot_dimension_numbers<[1], [0], [0], [1], [0, 0, 1, 1], [], []>} : vector<8x32xf32>, vector<32x256xf32>, vector<8x256xf32> -> vector<8x256xf32>
      %48 = vector.broadcast %46 : vector<8x1xf32> to vector<8x256xf32>
      %49 = arith.addf %47, %48 : vector<8x256xf32>
      %c0_37 = arith.constant 0 : index
      %c0_38 = arith.constant 0 : index
      %50 = vector.load %arg17[%c0_37, %c0_38] : memref<8x256xf32, #tpu.memory_space<vmem>>, vector<8x256xf32>
      tpu.vector_store %arg17[%c0_37, %c0_38], %49 {strides = array<i32>} : memref<8x256xf32, #tpu.memory_space<vmem>>, vector<8x256xf32>,
    } else {
    }
    %c0 = arith.constant 0 : index
    %c0_0 = arith.constant 0 : index
    %3 = vector.load %arg2[%c0, %c0_0] : memref<1x256xf32, #tpu.memory_space<vmem>>, vector<1x256xf32>
    %c0_1 = arith.constant 0 : index
    %c0_2 = arith.constant 0 : index
    %4 = vector.load %arg11[%c0_1, %c0_2] : memref<8x1xf32, #tpu.memory_space<vmem>>, vector<8x1xf32>
    %5 = vector.broadcast %4 : vector<8x1xf32> to vector<8x256xf32>
    %6 = vector.broadcast %3 : vector<1x256xf32> to vector<8x256xf32>
    %7 = arith.mulf %5, %6 : vector<8x256xf32>
    %c0_3 = arith.constant 0 : index
    %c0_4 = arith.constant 0 : index
    %8 = vector.load %arg14[%c0_3, %c0_4] : memref<8x1xf32, #tpu.memory_space<vmem>>, vector<8x1xf32>
    %9 = vector.broadcast %8 : vector<8x1xf32> to vector<8x256xf32>
    %10 = arith.addf %7, %9 : vector<8x256xf32>
    %11 = math.tanh %10 : vector<8x256xf32>
    %c0_5 = arith.constant 0 : index
    %c0_6 = arith.constant 0 : index
    %12 = vector.load %arg12[%c0_5, %c0_6] : memref<8x8xf32, #tpu.memory_space<vmem>>, vector<8x8xf32>
    %c0_7 = arith.constant 0 : index
    %c0_8 = arith.constant 0 : index
    %13 = vector.load %arg15[%c0_7, %c0_8] : memref<8x1xf32, #tpu.memory_space<vmem>>, vector<8x1xf32>
    %cst = arith.constant dense<0.000000e+00> : vector<8x256xf32>
    %14 = tpu.matmul %12, %11, %cst {dimension_numbers = #tpu.dot_dimension_numbers<[1], [0], [0], [1], [0, 0, 1, 1], [], []>} : vector<8x8xf32>, vector<8x256xf32>, vector<8x256xf32> -> vector<8x256xf32>
    %15 = vector.broadcast %13 : vector<8x1xf32> to vector<8x256xf32>
    %16 = arith.addf %14, %15 : vector<8x256xf32>
    %17 = math.tanh %16 : vector<8x256xf32>
    %c0_9 = arith.constant 0 : index
    %c0_10 = arith.constant 0 : index
    %18 = vector.load %arg13[%c0_9, %c0_10] : memref<4x8xf32, #tpu.memory_space<vmem>>, vector<4x8xf32>
    %c0_11 = arith.constant 0 : index
    %c0_12 = arith.constant 0 : index
    %19 = vector.load %arg16[%c0_11, %c0_12] : memref<4x1xf32, #tpu.memory_space<vmem>>, vector<4x1xf32>
    %cst_13 = arith.constant dense<0.000000e+00> : vector<4x256xf32>
    %20 = tpu.matmul %18, %17, %cst_13 {dimension_numbers = #tpu.dot_dimension_numbers<[1], [0], [0], [1], [0, 0, 1, 1], [], []>} : vector<4x8xf32>, vector<8x256xf32>, vector<4x256xf32> -> vector<4x256xf32>
    %21 = vector.broadcast %19 : vector<4x1xf32> to vector<4x256xf32>
    %22 = arith.addf %20, %21 : vector<4x256xf32>
    %c0_14 = arith.constant 0 : index
    %c0_15 = arith.constant 0 : index
    %23 = vector.load %arg18[%c0_14, %c0_15] : memref<4x256xf32, #tpu.memory_space<vmem>>, vector<4x256xf32>
    tpu.vector_store %arg18[%c0_14, %c0_15], %22 {strides = array<i32>} : memref<4x256xf32, #tpu.memory_space<vmem>>, vector<4x256xf32>,
    return
  }
  func.func @transform_0(%arg0: i32) -> (i32, i32) {
    %c0_i32 = arith.constant 0 : i32
    %c0_i32_0 = arith.constant 0 : i32
    return %c0_i32, %arg0 : i32, i32
  }
  func.func @transform_1(%arg0: i32) -> (i32, i32) {
    %c0_i32 = arith.constant 0 : i32
    %c0_i32_0 = arith.constant 0 : i32
    return %c0_i32, %arg0 : i32, i32
  }
  func.func @transform_2(%arg0: i32) -> (i32, i32) {
    %c0_i32 = arith.constant 0 : i32
    %c0_i32_0 = arith.constant 0 : i32
    %c0_i32_1 = arith.constant 0 : i32
    return %c0_i32, %c0_i32_0 : i32, i32
  }
  func.func @transform_3(%arg0: i32) -> (i32, i32) {
    %c0_i32 = arith.constant 0 : i32
    %c0_i32_0 = arith.constant 0 : i32
    %c0_i32_1 = arith.constant 0 : i32
    return %c0_i32, %c0_i32_0 : i32, i32
  }
  func.func @transform_4(%arg0: i32) -> (i32, i32) {
    %c0_i32 = arith.constant 0 : i32
    %c0_i32_0 = arith.constant 0 : i32
    %c0_i32_1 = arith.constant 0 : i32
    return %c0_i32, %c0_i32_0 : i32, i32
  }
  func.func @transform_5(%arg0: i32) -> (i32, i32) {
    %c0_i32 = arith.constant 0 : i32
    %c0_i32_0 = arith.constant 0 : i32
    %c0_i32_1 = arith.constant 0 : i32
    return %c0_i32, %c0_i32_0 : i32, i32
  }
  func.func @transform_6(%arg0: i32) -> (i32, i32) {
    %c0_i32 = arith.constant 0 : i32
    %c0_i32_0 = arith.constant 0 : i32
    %c0_i32_1 = arith.constant 0 : i32
    return %c0_i32, %c0_i32_0 : i32, i32
  }
  func.func @transform_7(%arg0: i32) -> (i32, i32) {
    %c0_i32 = arith.constant 0 : i32
    %c0_i32_0 = arith.constant 0 : i32
    %c0_i32_1 = arith.constant 0 : i32
    return %c0_i32, %c0_i32_0 : i32, i32
  }
  func.func @transform_8(%arg0: i32) -> (i32, i32) {
    %c0_i32 = arith.constant 0 : i32
    %c0_i32_0 = arith.constant 0 : i32
    %c0_i32_1 = arith.constant 0 : i32
    return %c0_i32, %c0_i32_0 : i32, i32
  }
  func.func @transform_9(%arg0: i32) -> (i32, i32) {
    %c0_i32 = arith.constant 0 : i32
    %c0_i32_0 = arith.constant 0 : i32
    %c0_i32_1 = arith.constant 0 : i32
    return %c0_i32, %c0_i32_0 : i32, i32
  }
  func.func @transform_10(%arg0: i32) -> (i32, i32) {
    %c0_i32 = arith.constant 0 : i32
    %c0_i32_0 = arith.constant 0 : i32
    %c0_i32_1 = arith.constant 0 : i32
    return %c0_i32, %c0_i32_0 : i32, i32
  }
  func.func @transform_11(%arg0: i32) -> (i32, i32) {
    %c0_i32 = arith.constant 0 : i32
    %c0_i32_0 = arith.constant 0 : i32
    %c0_i32_1 = arith.constant 0 : i32
    return %c0_i32, %c0_i32_0 : i32, i32
  }
  func.func @transform_12(%arg0: i32) -> (i32, i32) {
    %c0_i32 = arith.constant 0 : i32
    %c0_i32_0 = arith.constant 0 : i32
    %c0_i32_1 = arith.constant 0 : i32
    return %c0_i32, %c0_i32_0 : i32, i32
  }
  func.func @transform_13(%arg0: i32) -> (i32, i32) {
    %c0_i32 = arith.constant 0 : i32
    %c0_i32_0 = arith.constant 0 : i32
    %c0_i32_1 = arith.constant 0 : i32
    return %c0_i32, %c0_i32_0 : i32, i32
  }
  func.func @transform_14(%arg0: i32) -> (i32, i32) {
    %c0_i32 = arith.constant 0 : i32
    %c0_i32_0 = arith.constant 0 : i32
    %c0_i32_1 = arith.constant 0 : i32
    return %c0_i32, %c0_i32_0 : i32, i32
  }
  func.func @transform_15(%arg0: i32) -> (i32, i32) {
    %c0_i32 = arith.constant 0 : i32
    %c0_i32_0 = arith.constant 0 : i32
    %c0_i32_1 = arith.constant 0 : i32
    return %c0_i32, %c0_i32_0 : i32, i32
  }
  func.func @transform_16(%arg0: i32) -> (i32, i32) {
    %c0_i32 = arith.constant 0 : i32
    %c0_i32_0 = arith.constant 0 : i32
    return %c0_i32, %arg0 : i32, i32
  }
  func.func @transform_17(%arg0: i32) -> (i32, i32) {
    %c0_i32 = arith.constant 0 : i32
    %c0_i32_0 = arith.constant 0 : i32
    return %c0_i32, %arg0 : i32, i32
  }
}

</mosaic_0001>

<llo_original>
// kernel: tpu_custom_call.1
$region0: #{tpu_custom_call.1}
  #allocation0 [shape = 'u32[]', space=smem, size = 0x4, offset = 0x4, fixed_abs, tag = 'smem constant byte address 0x4 - core index']
  #allocation1 [shape = 'u32[144,128]{1,0:T(1,128)}', space=vmem, size = 0x12000, scoped, tag = 'internal scratch']
  %s0 = inlined_call_operand.vmem [shape: f32[1,768], index: 0, kind: input, shape index: {}]
  %s1 = inlined_call_operand.vmem [shape: f32[1,768], index: 1, kind: input, shape index: {}]
  %s2 = inlined_call_operand.vmem [shape: f32[32,1], index: 2, kind: input, shape index: {}]
  %s3 = inlined_call_operand.vmem [shape: f32[32,32], index: 3, kind: input, shape index: {}]
  %s4 = inlined_call_operand.vmem [shape: f32[32,32], index: 4, kind: input, shape index: {}]
  %s5 = inlined_call_operand.vmem [shape: f32[8,32], index: 5, kind: input, shape index: {}]
  %s6 = inlined_call_operand.vmem [shape: f32[32,1], index: 6, kind: input, shape index: {}]
  %s7 = inlined_call_operand.vmem [shape: f32[32,1], index: 7, kind: input, shape index: {}]
  %s8 = inlined_call_operand.vmem [shape: f32[32,1], index: 8, kind: input, shape index: {}]
  %s9 = inlined_call_operand.vmem [shape: f32[8,1], index: 9, kind: input, shape index: {}]
  %s10 = inlined_call_operand.vmem [shape: f32[8,1], index: 10, kind: input, shape index: {}]
  %s11 = inlined_call_operand.vmem [shape: f32[8,8], index: 11, kind: input, shape index: {}]
  %s12 = inlined_call_operand.vmem [shape: f32[4,8], index: 12, kind: input, shape index: {}]
  %s13 = inlined_call_operand.vmem [shape: f32[8,1], index: 13, kind: input, shape index: {}]
  %s14 = inlined_call_operand.vmem [shape: f32[8,1], index: 14, kind: input, shape index: {}]
  %s15 = inlined_call_operand.vmem [shape: f32[4,1], index: 15, kind: input, shape index: {}]
  %s16 = inlined_call_operand.hbm [shape: f32[8,768], index: 16, kind: output, shape index: {0}]
  %s17 = inlined_call_operand.hbm [shape: f32[4,768], index: 17, kind: output, shape index: {1}]
  %18 = xla_tuple %s16, %s17
  %s19 = sld [smem:[#allocation0]]
  $region109: #{tpu_custom_call.1} parent=0
    _
  %s21 = ssub.s32 1, %s19
  %s22 = scalar_select 0, %s21, %s19
  $region1: #{tpu_custom_call.1} parent=0
    #allocation2 [shape = 'u8[16384]{0}', space=vmem, size = 0x4000, scoped, tag = 'output window, operand 0']
    #allocation3 [shape = 's32[2]{0}', space=sflag, size = 0x8, scoped, tag = 'scoped memory for tpu_custom_call.1']
    #allocation4 [shape = 'u8[8192]{0}', space=vmem, size = 0x2000, scoped, tag = 'output window, operand 1']
    #allocation5 [shape = 's32[2]{0}', space=sflag, size = 0x8, scoped, tag = 'scoped memory for tpu_custom_call.1']
    %23 = vsyncpa [#allocation3], 0
    %s24 = scalar_lea.sflag [#allocation3], 1
    %25 = vsyncpa %s24, 0
    %26 = vsyncpa [#allocation5], 0
    %s27 = scalar_lea.sflag [#allocation5], 1
    %28 = vsyncpa %s27, 0
    loop: start=0, step=1, limit=5
    $region2: #{tpu_custom_call.1} parent=1 // loop_pre_header
      _
    $region3: #{tpu_custom_call.1} parent=1 // loop_header
      %s30 = sphi 0, %s34
      %p31 = scmp.ge.s32.totalorder %s30, 5
      %s40 = sphi 0, %s42
      %s43 = sphi 0, %s40
      %s44 = sphi 0, %s43
      %s60 = sphi 0, %s44
      %s66 = sphi 0, %s68
      %s69 = sphi 0, %s66
      %s70 = sphi 0, %s69
      %s86 = sphi 0, %s70
      %s90 = sphi 0, %s90
      %s92 = sphi 0, %s90
      %s93 = sphi 0, %s92
      %s107 = sphi 0, %s93
      %s111 = sphi 0, %s111
      %s113 = sphi 0, %s111
      %s114 = sphi 0, %s113
      %s128 = sphi 0, %s114
      %s132 = sphi 0, %s132
      %s134 = sphi 0, %s132
      %s135 = sphi 0, %s134
      %s149 = sphi 0, %s135
      %s153 = sphi 0, %s153
      %s155 = sphi 0, %s153
      %s156 = sphi 0, %s155
      %s170 = sphi 0, %s156
      %s174 = sphi 0, %s174
      %s176 = sphi 0, %s174
      %s177 = sphi 0, %s176
      %s191 = sphi 0, %s177
      %s195 = sphi 0, %s195
      %s197 = sphi 0, %s195
      %s198 = sphi 0, %s197
      %s212 = sphi 0, %s198
      %s216 = sphi 0, %s216
      %s218 = sphi 0, %s216
      %s219 = sphi 0, %s218
      %s233 = sphi 0, %s219
      %s237 = sphi 0, %s237
      %s239 = sphi 0, %s237
      %s240 = sphi 0, %s239
      %s254 = sphi 0, %s240
      %s258 = sphi 0, %s258
      %s260 = sphi 0, %s258
      %s261 = sphi 0, %s260
      %s275 = sphi 0, %s261
      %s279 = sphi 0, %s279
      %s281 = sphi 0, %s279
      %s282 = sphi 0, %s281
      %s296 = sphi 0, %s282
      %s300 = sphi 0, %s300
      %s302 = sphi 0, %s300
      %s303 = sphi 0, %s302
      %s317 = sphi 0, %s303
      %s321 = sphi 0, %s321
      %s323 = sphi 0, %s321
      %s324 = sphi 0, %s323
      %s338 = sphi 0, %s324
      %s342 = sphi 0, %s342
      %s344 = sphi 0, %s342
      %s345 = sphi 0, %s344
      %s359 = sphi 0, %s345
      %s363 = sphi 0, %s363
      %s365 = sphi 0, %s363
      %s366 = sphi 0, %s365
      %s380 = sphi 0, %s366
      %s386 = sphi 0, %s388
      %s389 = sphi 0, %s386
      %s390 = sphi 0, %s389
      %s406 = sphi 0, %s390
      %s412 = sphi 0, %s414
      %s415 = sphi 0, %s412
      %s416 = sphi 0, %s415
      %s432 = sphi 0, %s416
    $region4: #{tpu_custom_call.1} parent=1 // loop_header_branch
      %33 = sbr.rel (%p31) target = $region8
    $region5: #{tpu_custom_call.1} parent=1 // loop_body
      %s35 = ssub.s32 %s30, 1
      %s36 = ssub.s32 %s30, 2
      %s37 = sadd.s32 %s30, 1
      %s38 = ssub.s32 %s30, %s37
      %p39 = scmp.eq.s32.totalorder %s38, 0
      %s41 = sadd.s32 %s40, 1
      %s42 = scalar_select %p39, %s40, %s41
      %p45 = pneg %p39
      %p46 = scmp.eq.s32.totalorder %s30, 2
      %p47 = por %p45, %p46
      %p48 = scmp.ne.s32.totalorder %s40, %s43
      %p49 = scmp.eq.s32.totalorder %s30, 0
      %p50 = por %p48, %p49
      %p51 = scmp.ne.s32.totalorder %s40, %s43
      %p52 = scmp.eq.s32.totalorder %s35, 2
      %p53 = por %p51, %p52
      %p54 = scmp.ne.s32.totalorder %s43, %s44
      %p55 = scmp.eq.s32.totalorder %s35, 0
      %p56 = por %p54, %p55
      %p57 = scmp.ne.s32.totalorder %s43, %s44
      %p58 = scmp.eq.s32.totalorder %s36, 2
      %p59 = por %p57, %p58
      %p61 = scmp.ne.s32.totalorder %s44, %s60
      %p62 = scmp.eq.s32.totalorder %s36, 0
      %p63 = por %p61, %p62
      %s64 = ssub.s32 %s30, %s37
      %p65 = scmp.eq.s32.totalorder %s64, 0
      %s67 = sadd.s32 %s66, 1
      %s68 = scalar_select %p65, %s66, %s67
      %p71 = pneg %p65
      %p72 = scmp.eq.s32.totalorder %s30, 2
      %p73 = por %p71, %p72
      %p74 = scmp.ne.s32.totalorder %s66, %s69
      %p75 = scmp.eq.s32.totalorder %s30, 0
      %p76 = por %p74, %p75
      %p77 = scmp.ne.s32.totalorder %s66, %s69
      %p78 = scmp.eq.s32.totalorder %s35, 2
      %p79 = por %p77, %p78
      %p80 = scmp.ne.s32.totalorder %s69, %s70
      %p81 = scmp.eq.s32.totalorder %s35, 0
      %p82 = por %p80, %p81
      %p83 = scmp.ne.s32.totalorder %s69, %s70
      %p84 = scmp.eq.s32.totalorder %s36, 2
      %p85 = por %p83, %p84
      %p87 = scmp.ne.s32.totalorder %s70, %s86
      %p88 = scmp.eq.s32.totalorder %s36, 0
      %p89 = por %p87, %p88
      %s91 = sadd.s32 %s90, 1
      %p94 = scmp.eq.s32.totalorder %s30, 2
      %p95 = scmp.ne.s32.totalorder %s90, %s92
      %p96 = scmp.eq.s32.totalorder %s30, 0
      %p97 = por %p95, %p96
      %p98 = scmp.ne.s32.totalorder %s90, %s92
      %p99 = scmp.eq.s32.totalorder %s35, 2
      %p100 = por %p98, %p99
      %p101 = scmp.ne.s32.totalorder %s92, %s93
      %p102 = scmp.eq.s32.totalorder %s35, 0
      %p103 = por %p101, %p102
      %p104 = scmp.ne.s32.totalorder %s92, %s93
      %p105 = scmp.eq.s32.totalorder %s36, 2
      %p106 = por %p104, %p105
      %p108 = scmp.ne.s32.totalorder %s93, %s107
      %p109 = scmp.eq.s32.totalorder %s36, 0
      %p110 = por %p108, %p109
      %s112 = sadd.s32 %s111, 1
      %p115 = scmp.eq.s32.totalorder %s30, 2
      %p116 = scmp.ne.s32.totalorder %s111, %s113
      %p117 = scmp.eq.s32.totalorder %s30, 0
      %p118 = por %p116, %p117
      %p119 = scmp.ne.s32.totalorder %s111, %s113
      %p120 = scmp.eq.s32.totalorder %s35, 2
      %p121 = por %p119, %p120
      %p122 = scmp.ne.s32.totalorder %s113, %s114
      %p123 = scmp.eq.s32.totalorder %s35, 0
      %p124 = por %p122, %p123
      %p125 = scmp.ne.s32.totalorder %s113, %s114
      %p126 = scmp.eq.s32.totalorder %s36, 2
      %p127 = por %p125, %p126
      %p129 = scmp.ne.s32.totalorder %s114, %s128
      %p130 = scmp.eq.s32.totalorder %s36, 0
      %p131 = por %p129, %p130
      %s133 = sadd.s32 %s132, 1
      %p136 = scmp.eq.s32.totalorder %s30, 2
      %p137 = scmp.ne.s32.totalorder %s132, %s134
      %p138 = scmp.eq.s32.totalorder %s30, 0
      %p139 = por %p137, %p138
      %p140 = scmp.ne.s32.totalorder %s132, %s134
      %p141 = scmp.eq.s32.totalorder %s35, 2
      %p142 = por %p140, %p141
      %p143 = scmp.ne.s32.totalorder %s134, %s135
      %p144 = scmp.eq.s32.totalorder %s35, 0
      %p145 = por %p143, %p144
      %p146 = scmp.ne.s32.totalorder %s134, %s135
      %p147 = scmp.eq.s32.totalorder %s36, 2
      %p148 = por %p146, %p147
      %p150 = scmp.ne.s32.totalorder %s135, %s149
      %p151 = scmp.eq.s32.totalorder %s36, 0
      %p152 = por %p150, %p151
      %s154 = sadd.s32 %s153, 1
      %p157 = scmp.eq.s32.totalorder %s30, 2
      %p158 = scmp.ne.s32.totalorder %s153, %s155
      %p159 = scmp.eq.s32.totalorder %s30, 0
      %p160 = por %p158, %p159
      %p161 = scmp.ne.s32.totalorder %s153, %s155
      %p162 = scmp.eq.s32.totalorder %s35, 2
      %p163 = por %p161, %p162
      %p164 = scmp.ne.s32.totalorder %s155, %s156
      %p165 = scmp.eq.s32.totalorder %s35, 0
      %p166 = por %p164, %p165
      %p167 = scmp.ne.s32.totalorder %s155, %s156
      %p168 = scmp.eq.s32.totalorder %s36, 2
      %p169 = por %p167, %p168
      %p171 = scmp.ne.s32.totalorder %s156, %s170
      %p172 = scmp.eq.s32.totalorder %s36, 0
      %p173 = por %p171, %p172
      %s175 = sadd.s32 %s174, 1
      %p178 = scmp.eq.s32.totalorder %s30, 2
      %p179 = scmp.ne.s32.totalorder %s174, %s176
      %p180 = scmp.eq.s32.totalorder %s30, 0
      %p181 = por %p179, %p180
      %p182 = scmp.ne.s32.totalorder %s174, %s176
      %p183 = scmp.eq.s32.totalorder %s35, 2
      %p184 = por %p182, %p183
      %p185 = scmp.ne.s32.totalorder %s176, %s177
      %p186 = scmp.eq.s32.totalorder %s35, 0
      %p187 = por %p185, %p186
      %p188 = scmp.ne.s32.totalorder %s176, %s177
      %p189 = scmp.eq.s32.totalorder %s36, 2
      %p190 = por %p188, %p189
      %p192 = scmp.ne.s32.totalorder %s177, %s191
      %p193 = scmp.eq.s32.totalorder %s36, 0
      %p194 = por %p192, %p193
      %s196 = sadd.s32 %s195, 1
      %p199 = scmp.eq.s32.totalorder %s30, 2
      %p200 = scmp.ne.s32.totalorder %s195, %s197
      %p201 = scmp.eq.s32.totalorder %s30, 0
      %p202 = por %p200, %p201
      %p203 = scmp.ne.s32.totalorder %s195, %s197
      %p204 = scmp.eq.s32.totalorder %s35, 2
      %p205 = por %p203, %p204
      %p206 = scmp.ne.s32.totalorder %s197, %s198
      %p207 = scmp.eq.s32.totalorder %s35, 0
      %p208 = por %p206, %p207
      %p209 = scmp.ne.s32.totalorder %s197, %s198
      %p210 = scmp.eq.s32.totalorder %s36, 2
      %p211 = por %p209, %p210
      %p213 = scmp.ne.s32.totalorder %s198, %s212
      %p214 = scmp.eq.s32.totalorder %s36, 0
      %p215 = por %p213, %p214
      %s217 = sadd.s32 %s216, 1
      %p220 = scmp.eq.s32.totalorder %s30, 2
      %p221 = scmp.ne.s32.totalorder %s216, %s218
      %p222 = scmp.eq.s32.totalorder %s30, 0
      %p223 = por %p221, %p222
      %p224 = scmp.ne.s32.totalorder %s216, %s218
      %p225 = scmp.eq.s32.totalorder %s35, 2
      %p226 = por %p224, %p225
      %p227 = scmp.ne.s32.totalorder %s218, %s219
      %p228 = scmp.eq.s32.totalorder %s35, 0
      %p229 = por %p227, %p228
      %p230 = scmp.ne.s32.totalorder %s218, %s219
      %p231 = scmp.eq.s32.totalorder %s36, 2
      %p232 = por %p230, %p231
      %p234 = scmp.ne.s32.totalorder %s219, %s233
      %p235 = scmp.eq.s32.totalorder %s36, 0
      %p236 = por %p234, %p235
      %s238 = sadd.s32 %s237, 1
      %p241 = scmp.eq.s32.totalorder %s30, 2
      %p242 = scmp.ne.s32.totalorder %s237, %s239
      %p243 = scmp.eq.s32.totalorder %s30, 0
      %p244 = por %p242, %p243
      %p245 = scmp.ne.s32.totalorder %s237, %s239
      %p246 = scmp.eq.s32.totalorder %s35, 2
      %p247 = por %p245, %p246
      %p248 = scmp.ne.s32.totalorder %s239, %s240
      %p249 = scmp.eq.s32.totalorder %s35, 0
      %p250 = por %p248, %p249
      %p251 = scmp.ne.s32.totalorder %s239, %s240
      %p252 = scmp.eq.s32.totalorder %s36, 2
      %p253 = por %p251, %p252
      %p255 = scmp.ne.s32.totalorder %s240, %s254
      %p256 = scmp.eq.s32.totalorder %s36, 0
      %p257 = por %p255, %p256
      %s259 = sadd.s32 %s258, 1
      %p262 = scmp.eq.s32.totalorder %s30, 2
      %p263 = scmp.ne.s32.totalorder %s258, %s260
      %p264 = scmp.eq.s32.totalorder %s30, 0
      %p265 = por %p263, %p264
      %p266 = scmp.ne.s32.totalorder %s258, %s260
      %p267 = scmp.eq.s32.totalorder %s35, 2
      %p268 = por %p266, %p267
      %p269 = scmp.ne.s32.totalorder %s260, %s261
      %p270 = scmp.eq.s32.totalorder %s35, 0
      %p271 = por %p269, %p270
      %p272 = scmp.ne.s32.totalorder %s260, %s261
      %p273 = scmp.eq.s32.totalorder %s36, 2
      %p274 = por %p272, %p273
      %p276 = scmp.ne.s32.totalorder %s261, %s275
      %p277 = scmp.eq.s32.totalorder %s36, 0
      %p278 = por %p276, %p277
      %s280 = sadd.s32 %s279, 1
      %p283 = scmp.eq.s32.totalorder %s30, 2
      %p284 = scmp.ne.s32.totalorder %s279, %s281
      %p285 = scmp.eq.s32.totalorder %s30, 0
      %p286 = por %p284, %p285
      %p287 = scmp.ne.s32.totalorder %s279, %s281
      %p288 = scmp.eq.s32.totalorder %s35, 2
      %p289 = por %p287, %p288
      %p290 = scmp.ne.s32.totalorder %s281, %s282
      %p291 = scmp.eq.s32.totalorder %s35, 0
      %p292 = por %p290, %p291
      %p293 = scmp.ne.s32.totalorder %s281, %s282
      %p294 = scmp.eq.s32.totalorder %s36, 2
      %p295 = por %p293, %p294
      %p297 = scmp.ne.s32.totalorder %s282, %s296
      %p298 = scmp.eq.s32.totalorder %s36, 0
      %p299 = por %p297, %p298
      %s301 = sadd.s32 %s300, 1
      %p304 = scmp.eq.s32.totalorder %s30, 2
      %p305 = scmp.ne.s32.totalorder %s300, %s302
      %p306 = scmp.eq.s32.totalorder %s30, 0
      %p307 = por %p305, %p306
      %p308 = scmp.ne.s32.totalorder %s300, %s302
      %p309 = scmp.eq.s32.totalorder %s35, 2
      %p310 = por %p308, %p309
      %p311 = scmp.ne.s32.totalorder %s302, %s303
      %p312 = scmp.eq.s32.totalorder %s35, 0
      %p313 = por %p311, %p312
      %p314 = scmp.ne.s32.totalorder %s302, %s303
      %p315 = scmp.eq.s32.totalorder %s36, 2
      %p316 = por %p314, %p315
      %p318 = scmp.ne.s32.totalorder %s303, %s317
      %p319 = scmp.eq.s32.totalorder %s36, 0
      %p320 = por %p318, %p319
      %s322 = sadd.s32 %s321, 1
      %p325 = scmp.eq.s32.totalorder %s30, 2
      %p326 = scmp.ne.s32.totalorder %s321, %s323
      %p327 = scmp.eq.s32.totalorder %s30, 0
      %p328 = por %p326, %p327
      %p329 = scmp.ne.s32.totalorder %s321, %s323
      %p330 = scmp.eq.s32.totalorder %s35, 2
      %p331 = por %p329, %p330
      %p332 = scmp.ne.s32.totalorder %s323, %s324
      %p333 = scmp.eq.s32.totalorder %s35, 0
      %p334 = por %p332, %p333
      %p335 = scmp.ne.s32.totalorder %s323, %s324
      %p336 = scmp.eq.s32.totalorder %s36, 2
      %p337 = por %p335, %p336
      %p339 = scmp.ne.s32.totalorder %s324, %s338
      %p340 = scmp.eq.s32.totalorder %s36, 0
      %p341 = por %p339, %p340
      %s343 = sadd.s32 %s342, 1
      %p346 = scmp.eq.s32.totalorder %s30, 2
      %p347 = scmp.ne.s32.totalorder %s342, %s344
      %p348 = scmp.eq.s32.totalorder %s30, 0
      %p349 = por %p347, %p348
      %p350 = scmp.ne.s32.totalorder %s342, %s344
      %p351 = scmp.eq.s32.totalorder %s35, 2
      %p352 = por %p350, %p351
      %p353 = scmp.ne.s32.totalorder %s344, %s345
      %p354 = scmp.eq.s32.totalorder %s35, 0
      %p355 = por %p353, %p354
      %p356 = scmp.ne.s32.totalorder %s344, %s345
      %p357 = scmp.eq.s32.totalorder %s36, 2
      %p358 = por %p356, %p357
      %p360 = scmp.ne.s32.totalorder %s345, %s359
      %p361 = scmp.eq.s32.totalorder %s36, 0
      %p362 = por %p360, %p361
      %s364 = sadd.s32 %s363, 1
      %p367 = scmp.eq.s32.totalorder %s30, 2
      %p368 = scmp.ne.s32.totalorder %s363, %s365
      %p369 = scmp.eq.s32.totalorder %s30, 0
      %p370 = por %p368, %p369
      %p371 = scmp.ne.s32.totalorder %s363, %s365
      %p372 = scmp.eq.s32.totalorder %s35, 2
      %p373 = por %p371, %p372
      %p374 = scmp.ne.s32.totalorder %s365, %s366
      %p375 = scmp.eq.s32.totalorder %s35, 0
      %p376 = por %p374, %p375
      %p377 = scmp.ne.s32.totalorder %s365, %s366
      %p378 = scmp.eq.s32.totalorder %s36, 2
      %p379 = por %p377, %p378
      %p381 = scmp.ne.s32.totalorder %s366, %s380
      %p382 = scmp.eq.s32.totalorder %s36, 0
      %p383 = por %p381, %p382
      %s384 = ssub.s32 %s30, %s37
      %p385 = scmp.eq.s32.totalorder %s384, 0
      %s387 = sadd.s32 %s386, 1
      %s388 = scalar_select %p385, %s386, %s387
      %p391 = pneg %p385
      %p392 = scmp.eq.s32.totalorder %s30, 2
      %p393 = por %p391, %p392
      %p394 = scmp.ne.s32.totalorder %s386, %s389
      %p395 = scmp.eq.s32.totalorder %s30, 0
      %p396 = por %p394, %p395
      %p397 = scmp.ne.s32.totalorder %s386, %s389
      %p398 = scmp.eq.s32.totalorder %s35, 2
      %p399 = por %p397, %p398
      %p400 = scmp.ne.s32.totalorder %s389, %s390
      %p401 = scmp.eq.s32.totalorder %s35, 0
      %p402 = por %p400, %p401
      %p403 = scmp.ne.s32.totalorder %s389, %s390
      %p404 = scmp.eq.s32.totalorder %s36, 2
      %p405 = por %p403, %p404
      %p407 = scmp.ne.s32.totalorder %s390, %s406
      %p408 = scmp.eq.s32.totalorder %s36, 0
      %p409 = por %p407, %p408
      %s410 = ssub.s32 %s30, %s37
      %p411 = scmp.eq.s32.totalorder %s410, 0
      %s413 = sadd.s32 %s412, 1
      %s414 = scalar_select %p411, %s412, %s413
      %p417 = pneg %p411
      %p418 = scmp.eq.s32.totalorder %s30, 2
      %p419 = por %p417, %p418
      %p420 = scmp.ne.s32.totalorder %s412, %s415
      %p421 = scmp.eq.s32.totalorder %s30, 0
      %p422 = por %p420, %p421
      %p423 = scmp.ne.s32.totalorder %s412, %s415
      %p424 = scmp.eq.s32.totalorder %s35, 2
      %p425 = por %p423, %p424
      %p426 = scmp.ne.s32.totalorder %s415, %s416
      %p427 = scmp.eq.s32.totalorder %s35, 0
      %p428 = por %p426, %p427
      %p429 = scmp.ne.s32.totalorder %s415, %s416
      %p430 = scmp.eq.s32.totalorder %s36, 2
      %p431 = por %p429, %p430
      %p433 = scmp.ne.s32.totalorder %s416, %s432
      %p434 = scmp.eq.s32.totalorder %s36, 0
      %p435 = por %p433, %p434
      %p436 = scmp.le.s32.totalorder 1, %s30
      %p437 = scmp.lt.s32.totalorder %s30, 4
      %p438 = pnand %p436, %p437
      %p439 = pneg %p438
      // Predicated region
      $region9: #{tpu_custom_call.1} parent=5 // pred_check
        _
      $region10: #{tpu_custom_call.1} parent=5 // pred_check_branch
        %441 = sbr.rel (%p438) target = $region12
      $region11: #{tpu_custom_call.1} parent=5 // pred_region
        %s442 = ssub.s32 %s30, 1
        // Predicated region
        $region13: #{tpu_custom_call.1} parent=11 // pred_check
          %p443 = pneg %p103
        $region14: #{tpu_custom_call.1} parent=11 // pred_check_branch
          %445 = sbr.rel (%p443) target = $region16
        $region15: #{tpu_custom_call.1} parent=11 // pred_region
          _
        $region16: #{tpu_custom_call.1} parent=11 // pred_fallthru
          _
        // Predicated region
        $region17: #{tpu_custom_call.1} parent=11 // pred_check
          %p446 = pneg %p124
        $region18: #{tpu_custom_call.1} parent=11 // pred_check_branch
          %448 = sbr.rel (%p446) target = $region20
        $region19: #{tpu_custom_call.1} parent=11 // pred_region
          _
        $region20: #{tpu_custom_call.1} parent=11 // pred_fallthru
          _
        // Predicated region
        $region21: #{tpu_custom_call.1} parent=11 // pred_check
          %p449 = pneg %p145
        $region22: #{tpu_custom_call.1} parent=11 // pred_check_branch
          %451 = sbr.rel (%p449) target = $region24
        $region23: #{tpu_custom_call.1} parent=11 // pred_region
          _
        $region24: #{tpu_custom_call.1} parent=11 // pred_fallthru
          _
        // Predicated region
        $region25: #{tpu_custom_call.1} parent=11 // pred_check
          %p452 = pneg %p166
        $region26: #{tpu_custom_call.1} parent=11 // pred_check_branch
          %454 = sbr.rel (%p452) target = $region28
        $region27: #{tpu_custom_call.1} parent=11 // pred_region
          _
        $region28: #{tpu_custom_call.1} parent=11 // pred_fallthru
          _
        // Predicated region
        $region29: #{tpu_custom_call.1} parent=11 // pred_check
          %p455 = pneg %p187
        $region30: #{tpu_custom_call.1} parent=11 // pred_check_branch
          %457 = sbr.rel (%p455) target = $region32
        $region31: #{tpu_custom_call.1} parent=11 // pred_region
          _
        $region32: #{tpu_custom_call.1} parent=11 // pred_fallthru
          _
        // Predicated region
        $region33: #{tpu_custom_call.1} parent=11 // pred_check
          %p458 = pneg %p208
        $region34: #{tpu_custom_call.1} parent=11 // pred_check_branch
          %460 = sbr.rel (%p458) target = $region36
        $region35: #{tpu_custom_call.1} parent=11 // pred_region
          _
        $region36: #{tpu_custom_call.1} parent=11 // pred_fallthru
          _
        // Predicated region
        $region37: #{tpu_custom_call.1} parent=11 // pred_check
          %p461 = pneg %p229
        $region38: #{tpu_custom_call.1} parent=11 // pred_check_branch
          %463 = sbr.rel (%p461) target = $region40
        $region39: #{tpu_custom_call.1} parent=11 // pred_region
          _
        $region40: #{tpu_custom_call.1} parent=11 // pred_fallthru
          _
        // Predicated region
        $region41: #{tpu_custom_call.1} parent=11 // pred_check
          %p464 = pneg %p250
        $region42: #{tpu_custom_call.1} parent=11 // pred_check_branch
          %466 = sbr.rel (%p464) target = $region44
        $region43: #{tpu_custom_call.1} parent=11 // pred_region
          _
        $region44: #{tpu_custom_call.1} parent=11 // pred_fallthru
          _
        // Predicated region
        $region45: #{tpu_custom_call.1} parent=11 // pred_check
          %p467 = pneg %p271
        $region46: #{tpu_custom_call.1} parent=11 // pred_check_branch
          %469 = sbr.rel (%p467) target = $region48
        $region47: #{tpu_custom_call.1} parent=11 // pred_region
          _
        $region48: #{tpu_custom_call.1} parent=11 // pred_fallthru
          _
        // Predicated region
        $region49: #{tpu_custom_call.1} parent=11 // pred_check
          %p470 = pneg %p292
        $region50: #{tpu_custom_call.1} parent=11 // pred_check_branch
          %472 = sbr.rel (%p470) target = $region52
        $region51: #{tpu_custom_call.1} parent=11 // pred_region
          _
        $region52: #{tpu_custom_call.1} parent=11 // pred_fallthru
          _
        // Predicated region
        $region53: #{tpu_custom_call.1} parent=11 // pred_check
          %p473 = pneg %p313
        $region54: #{tpu_custom_call.1} parent=11 // pred_check_branch
          %475 = sbr.rel (%p473) target = $region56
        $region55: #{tpu_custom_call.1} parent=11 // pred_region
          _
        $region56: #{tpu_custom_call.1} parent=11 // pred_fallthru
          _
        // Predicated region
        $region57: #{tpu_custom_call.1} parent=11 // pred_check
          %p476 = pneg %p334
        $region58: #{tpu_custom_call.1} parent=11 // pred_check_branch
          %478 = sbr.rel (%p476) target = $region60
        $region59: #{tpu_custom_call.1} parent=11 // pred_region
          _
        $region60: #{tpu_custom_call.1} parent=11 // pred_fallthru
          _
        // Predicated region
        $region61: #{tpu_custom_call.1} parent=11 // pred_check
          %p479 = pneg %p355
        $region62: #{tpu_custom_call.1} parent=11 // pred_check_branch
          %481 = sbr.rel (%p479) target = $region64
        $region63: #{tpu_custom_call.1} parent=11 // pred_region
          _
        $region64: #{tpu_custom_call.1} parent=11 // pred_fallthru
          _
        // Predicated region
        $region65: #{tpu_custom_call.1} parent=11 // pred_check
          %p482 = pneg %p376
        $region66: #{tpu_custom_call.1} parent=11 // pred_check_branch
          %484 = sbr.rel (%p482) target = $region68
        $region67: #{tpu_custom_call.1} parent=11 // pred_region
          _
        $region68: #{tpu_custom_call.1} parent=11 // pred_fallthru
          _
      $region12: #{tpu_custom_call.1} parent=5 // pred_fallthru
        _
      %p485 = scmp.lt.s32.totalorder %s30, 3
      // Predicated region
      $region69: #{tpu_custom_call.1} parent=5 // pred_check
        %p486 = pneg %p485
      $region70: #{tpu_custom_call.1} parent=5 // pred_check_branch
        %488 = sbr.rel (%p486) target = $region72
      $region71: #{tpu_custom_call.1} parent=5 // pred_region
        // Predicated region
        $region73: #{tpu_custom_call.1} parent=71 // pred_check
          %p489 = pneg %p50
        $region74: #{tpu_custom_call.1} parent=71 // pred_check_branch
          %491 = sbr.rel (%p489) target = $region76
        $region75: #{tpu_custom_call.1} parent=71 // pred_region
          %s492 = smul.u32 2, %s30
          %p493 = scmp.lt.s32.totalorder %s492, 5
          %s494 = scalar_select %p493, %s492, 5
          %s495 = scalar_lea.vmem %s0, %s494
          %s496 = smul.u32 2, %s30
        $region76: #{tpu_custom_call.1} parent=71 // pred_fallthru
          _
        // Predicated region
        $region77: #{tpu_custom_call.1} parent=71 // pred_check
          %p497 = pneg %p76
        $region78: #{tpu_custom_call.1} parent=71 // pred_check_branch
          %499 = sbr.rel (%p497) target = $region80
        $region79: #{tpu_custom_call.1} parent=71 // pred_region
          %s500 = smul.u32 2, %s30
          %p501 = scmp.lt.s32.totalorder %s500, 5
          %s502 = scalar_select %p501, %s500, 5
          %s503 = scalar_lea.vmem %s1, %s502
          %s504 = smul.u32 2, %s30
        $region80: #{tpu_custom_call.1} parent=71 // pred_fallthru
          _
      $region72: #{tpu_custom_call.1} parent=5 // pred_fallthru
        _
      %p505 = scmp.le.s32.totalorder 1, %s30
      %p506 = scmp.lt.s32.totalorder %s30, 4
      %p507 = pnand %p505, %p506
      %p508 = pneg %p507
      // Predicated region
      $region81: #{tpu_custom_call.1} parent=5 // pred_check
        _
      $region82: #{tpu_custom_call.1} parent=5 // pred_check_branch
        %510 = sbr.rel (%p507) target = $region84
      $region83: #{tpu_custom_call.1} parent=5 // pred_region
        %s511 = ssub.s32 %s30, 1
        %s512 = smul.u32 2, %s35
        %p513 = scmp.lt.s32.totalorder %s512, 5
        %s514 = scalar_select %p513, %s512, 5
        %s515 = scalar_lea.vmem %s0, %s514
        %p516 = pneg %p56
        %p517 = pneg %p53
        %s518 = smul.u32 2, %s35
        %p519 = scmp.lt.s32.totalorder %s518, 5
        %s520 = scalar_select %p519, %s518, 5
        %s521 = scalar_lea.vmem %s1, %s520
        %p522 = pneg %p82
        %p523 = pneg %p79
        %p524 = pneg %p103
        %p525 = pneg %p100
        %p526 = pneg %p124
        %p527 = pneg %p121
        %p528 = pneg %p145
        %p529 = pneg %p142
        %p530 = pneg %p166
        %p531 = pneg %p163
        %p532 = pneg %p187
        %p533 = pneg %p184
        %p534 = pneg %p208
        %p535 = pneg %p205
        %p536 = pneg %p229
        %p537 = pneg %p226
        %p538 = pneg %p250
        %p539 = pneg %p247
        %p540 = pneg %p271
        %p541 = pneg %p268
        %p542 = pneg %p292
        %p543 = pneg %p289
        %p544 = pneg %p313
        %p545 = pneg %p310
        %p546 = pneg %p334
        %p547 = pneg %p331
        %p548 = pneg %p355
        %p549 = pneg %p352
        %p550 = pneg %p376
        %p551 = pneg %p373
        %p552 = pneg %p402
        %p553 = pneg %p399
        %s554 = sand.u32 %s389, 1
        %s555 = scalar_lea.sflag [#allocation3], %s554
        %s556 = sand.u32 %s389, 1
        %s557 = smul.addr %s556, 16
        %s558 = scalar_lea.vmem [#allocation2], %s557
        %p559 = pneg %p428
        %p560 = pneg %p425
        %s561 = sand.u32 %s415, 1
        %s562 = scalar_lea.sflag [#allocation5], %s561
        %s563 = sand.u32 %s415, 1
        %s564 = smul.addr %s563, 8
        %s565 = scalar_lea.vmem [#allocation4], %s564
        %s566 = smul.u32 2, %s35
        %p567 = scmp.lt.s32.totalorder %s566, 5
        %s568 = scalar_select %p567, %s566, 5
        %s569 = scalar_lea.vmem %s0, %s568
        %s570 = smul.u32 2, %s35
        %s571 = smul.u32 2, %s35
        %p572 = scmp.lt.s32.totalorder %s571, 5
        %s573 = scalar_select %p572, %s571, 5
        %s574 = scalar_lea.vmem %s1, %s573
        %s575 = smul.u32 2, %s35
        %s576 = smul.u32 2, %s35
        %s577 = smul.u32 2, %s35
        %p578 = scmp.lt.s32.totalorder %s35, 1
        // Predicated region
        $region85: #{tpu_custom_call.1} parent=83 // pred_check
          %p579 = pneg %p578
        $region86: #{tpu_custom_call.1} parent=83 // pred_check_branch
          %581 = sbr.rel (%p579) target = $region88
        $region87: #{tpu_custom_call.1} parent=83 // pred_region
          %v582 = vld [vmem:[%s569] sm:$0x3]
          %v583 = vld [vmem:[%s2] sm:$0xff]
          %v584 = vld [vmem:[%s2 + $0x8] sm:$0xff]
          %v585 = vld [vmem:[%s2 + $0x10] sm:$0xff]
          %v586 = vld [vmem:[%s2 + $0x18] sm:$0xff]
          %588 = vset.pattern.permute.xlu0 0
          %589 = vperm.xlu0 %588, %v583
          %v590 = vpop.permute.xlu0 %589
          %593 = vset.pattern.permute.xlu0 0
          %594 = vperm.xlu0 %593, %v584
          %v595 = vpop.permute.xlu0 %594
          %598 = vset.pattern.permute.xlu0 0
          %599 = vperm.xlu0 %598, %v585
          %v600 = vpop.permute.xlu0 %599
          %603 = vset.pattern.permute.xlu0 0
          %604 = vperm.xlu0 %603, %v586
          %v605 = vpop.permute.xlu0 %604
          %v608 = vlaneseq
          %v609 = vshrl.u32 %v608, 7
          %v610 = vsub.s32 0, %v609
          %v611 = vrot.slane %v582, %v610
          %v612 = vlaneseq
          %v613 = vshrl.u32 %v612, 7
          %v614 = vsub.s32 1, %v613
          %v615 = vrot.slane %v582, %v614
          %v618 = vmul.f32 %v590, %v611
          %v619 = vmul.f32 %v590, %v615
          %v620 = vmul.f32 %v595, %v611
          %v621 = vmul.f32 %v595, %v615
          %v622 = vmul.f32 %v600, %v611
          %v623 = vmul.f32 %v600, %v615
          %v624 = vmul.f32 %v605, %v611
          %v625 = vmul.f32 %v605, %v615
          %v626 = vld [vmem:[%s6] sm:$0xff]
          %v627 = vld [vmem:[%s6 + $0x8] sm:$0xff]
          %v628 = vld [vmem:[%s6 + $0x10] sm:$0xff]
          %v629 = vld [vmem:[%s6 + $0x18] sm:$0xff]
          %631 = vset.pattern.permute.xlu0 0
          %632 = vperm.xlu0 %631, %v626
          %v633 = vpop.permute.xlu0 %632
          %636 = vset.pattern.permute.xlu0 0
          %637 = vperm.xlu0 %636, %v627
          %v638 = vpop.permute.xlu0 %637
          %641 = vset.pattern.permute.xlu0 0
          %642 = vperm.xlu0 %641, %v628
          %v643 = vpop.permute.xlu0 %642
          %646 = vset.pattern.permute.xlu0 0
          %647 = vperm.xlu0 %646, %v629
          %v648 = vpop.permute.xlu0 %647
          %v650 = vadd.f32 %v618, %v633
          %v651 = vadd.f32 %v619, %v633
          %v652 = vadd.f32 %v620, %v638
          %v653 = vadd.f32 %v621, %v638
          %v654 = vadd.f32 %v622, %v643
          %v655 = vadd.f32 %v623, %v643
          %v656 = vadd.f32 %v624, %v648
          %v657 = vadd.f32 %v625, %v648
          %v658 = vtanh.pop %v650
          %v659 = vtanh.pop %v651
          %v660 = vtanh.pop %v652
          %v661 = vtanh.pop %v653
          %v662 = vtanh.pop %v654
          %v663 = vtanh.pop %v655
          %v664 = vtanh.pop %v656
          %v665 = vtanh.pop %v657
          %v666 = vld [vmem:[%s3] sm:$0xff]
          %v667 = vld [vmem:[%s3 + $0x8] sm:$0xff]
          %v668 = vld [vmem:[%s3 + $0x10] sm:$0xff]
          %v669 = vld [vmem:[%s3 + $0x18] sm:$0xff]
          %v670 = vld [vmem:[%s7] sm:$0xff]
          %v671 = vld [vmem:[%s7 + $0x8] sm:$0xff]
          %v672 = vld [vmem:[%s7 + $0x10] sm:$0xff]
          %v673 = vld [vmem:[%s7 + $0x18] sm:$0xff]
          %675 = vset.pattern.permute.xlu0 0
          %676 = vperm.xlu0 %675, %v670
          %v677 = vpop.permute.xlu0 %676
          %680 = vset.pattern.permute.xlu0 0
          %681 = vperm.xlu0 %680, %v671
          %v682 = vpop.permute.xlu0 %681
          %685 = vset.pattern.permute.xlu0 0
          %686 = vperm.xlu0 %685, %v672
          %v687 = vpop.permute.xlu0 %686
          %690 = vset.pattern.permute.xlu0 0
          %691 = vperm.xlu0 %690, %v673
          %v692 = vpop.permute.xlu0 %691
          %vm694 = vcmask 261120
          %v696 = vsel %vm694, %v666, 0
          %v699 = vsel %vm694, %v667, 0
          %v702 = vsel %vm694, %v668, 0
          %v705 = vsel %vm694, %v669, 0
          %707 = vmatprep.subr.mxu0 0.0
          %708 = vmatpush1.msra.mxu0 0.0
          %709 = vmatprep.subr.mxu0 0.0
          %710 = vmatpush1.msra.mxu0 0.0
          %711 = vmatprep.subr.mxu0 0.0
          %712 = vmatpush1.msra.mxu0 0.0
          %713 = vmatprep.subr.mxu0 0.0
          %714 = vmatpush1.msra.mxu0 0.0
          %715 = vmatprep.subr.mxu0 0.0
          %716 = vmatpush1.msra.mxu0 0.0
          %717 = vmatprep.subr.mxu0 0.0
          %718 = vmatpush1.msra.mxu0 0.0
          %719 = vmatprep.subr.mxu0 0.0
          %720 = vmatpush1.msra.mxu0 0.0
          %721 = vmatprep.subr.mxu0 0.0
          %722 = vmatpush1.msra.mxu0 0.0
          %723 = vmatprep.subr.mxu0 0.0
          %724 = vmatpush1.msra.mxu0 0.0
          %725 = vmatprep.subr.mxu0 0.0
          %726 = vmatpush1.msra.mxu0 0.0
          %727 = vmatprep.subr.mxu0 0.0
          %728 = vmatpush1.msra.mxu0 0.0
          %729 = vmatprep.subr.mxu0 0.0
          %730 = vmatpush1.msra.mxu0 0.0
          %731 = vmatprep.subr.mxu0 %v665
          %732 = vmatpush1.msra.mxu0 %v664
          %733 = vmatprep.subr.mxu0 %v663
          %734 = vmatpush1.msra.mxu0 %v662
          %735 = vmatprep.subr.mxu0 %v661
          %736 = vmatpush1.msra.mxu0 %v660
          %737 = vmatprep.subr.mxu0 %v659
          %738 = vmatpush1.msra.mxu0 %v658
          %739 = vmatprep.subr.mxu0 0.0
          %740 = vmatpush2.msra.mxu0 0.0
          %741 = vmatprep.subr.mxu0 0.0
          %742 = vmatpush2.msra.mxu0 0.0
          %743 = vmatprep.subr.mxu0 0.0
          %744 = vmatpush2.msra.mxu0 0.0
          %745 = vmatprep.subr.mxu0 0.0
          %746 = vmatpush2.msra.mxu0 0.0
          %747 = vmatprep.subr.mxu0 0.0
          %748 = vmatpush2.msra.mxu0 0.0
          %749 = vmatprep.subr.mxu0 0.0
          %750 = vmatpush2.msra.mxu0 0.0
          %751 = vmatprep.subr.mxu0 0.0
          %752 = vmatpush2.msra.mxu0 0.0
          %753 = vmatprep.subr.mxu0 0.0
          %754 = vmatpush2.msra.mxu0 0.0
          %755 = vmatprep.subr.mxu0 0.0
          %756 = vmatpush2.msra.mxu0 0.0
          %757 = vmatprep.subr.mxu0 0.0
          %758 = vmatpush2.msra.mxu0 0.0
          %759 = vmatprep.subr.mxu0 0.0
          %760 = vmatpush2.msra.mxu0 0.0
          %761 = vmatprep.subr.mxu0 0.0
          %762 = vmatpush2.msra.mxu0 0.0
          %763 = vmatprep.subr.mxu0 0.0
          %764 = vmatpush2.msra.mxu0 0.0
          %765 = vmatprep.subr.mxu0 0.0
          %766 = vmatpush2.msra.mxu0 0.0
          %767 = vmatprep.subr.mxu0 0.0
          %768 = vmatpush2.msra.mxu0 0.0
          %769 = vmatprep.subr.mxu0 0.0
          %770 = vmatpush2.msra.mxu0 0.0
          %771 = vmatprep.mubr.f32.mxu0 0.0
          %772 = vmatmul.mubr.f32.gmra.mxu0 %v696
          %v773 = vpop.f32.mrf.mxu0
          %v774 = vadd.f32 %v677, %v773
          %v775 = vpop.f32.mrf.mxu0
          %v776 = vadd.f32 %v677, %v775
          %777 = vmatprep.mubr.f32.mxu0 0.0
          %778 = vmatmul.mubr.f32.gmra.mxu0 %v699
          %v779 = vpop.f32.mrf.mxu0
          %v780 = vadd.f32 %v682, %v779
          %v781 = vpop.f32.mrf.mxu0
          %v782 = vadd.f32 %v682, %v781
          %783 = vmatprep.mubr.f32.mxu0 0.0
          %784 = vmatmul.mubr.f32.gmra.mxu0 %v702
          %v785 = vpop.f32.mrf.mxu0
          %v786 = vadd.f32 %v687, %v785
          %v787 = vpop.f32.mrf.mxu0
          %v788 = vadd.f32 %v687, %v787
          %789 = vmatprep.mubr.f32.mxu0 0.0
          %790 = vmatmul.mubr.f32.gmra.mxu0 %v705
          %v791 = vpop.f32.mrf.mxu0
          %v792 = vadd.f32 %v692, %v791
          %v793 = vpop.f32.mrf.mxu0
          %v794 = vadd.f32 %v692, %v793
          %795 = vdwg.mxu0
          %v796 = vtanh.pop %v774
          %v797 = vtanh.pop %v776
          %v798 = vtanh.pop %v780
          %v799 = vtanh.pop %v782
          %v800 = vtanh.pop %v786
          %v801 = vtanh.pop %v788
          %v802 = vtanh.pop %v792
          %v803 = vtanh.pop %v794
          %v804 = vld [vmem:[%s4] sm:$0xff]
          %v805 = vld [vmem:[%s4 + $0x8] sm:$0xff]
          %v806 = vld [vmem:[%s4 + $0x10] sm:$0xff]
          %v807 = vld [vmem:[%s4 + $0x18] sm:$0xff]
          %v808 = vld [vmem:[%s8] sm:$0xff]
          %v809 = vld [vmem:[%s8 + $0x8] sm:$0xff]
          %v810 = vld [vmem:[%s8 + $0x10] sm:$0xff]
          %v811 = vld [vmem:[%s8 + $0x18] sm:$0xff]
          %813 = vset.pattern.permute.xlu0 0
          %814 = vperm.xlu0 %813, %v808
          %v815 = vpop.permute.xlu0 %814
          %818 = vset.pattern.permute.xlu0 0
          %819 = vperm.xlu0 %818, %v809
          %v820 = vpop.permute.xlu0 %819
          %823 = vset.pattern.permute.xlu0 0
          %824 = vperm.xlu0 %823, %v810
          %v825 = vpop.permute.xlu0 %824
          %828 = vset.pattern.permute.xlu0 0
          %829 = vperm.xlu0 %828, %v811
          %v830 = vpop.permute.xlu0 %829
          %v833 = vsel %vm694, %v804, 0
          %v836 = vsel %vm694, %v805, 0
          %v839 = vsel %vm694, %v806, 0
          %v842 = vsel %vm694, %v807, 0
          %844 = vmatprep.subr.mxu0 0.0
          %845 = vmatpush1.msra.mxu0 0.0
          %846 = vmatprep.subr.mxu0 0.0
          %847 = vmatpush1.msra.mxu0 0.0
          %848 = vmatprep.subr.mxu0 0.0
          %849 = vmatpush1.msra.mxu0 0.0
          %850 = vmatprep.subr.mxu0 0.0
          %851 = vmatpush1.msra.mxu0 0.0
          %852 = vmatprep.subr.mxu0 0.0
          %853 = vmatpush1.msra.mxu0 0.0
          %854 = vmatprep.subr.mxu0 0.0
          %855 = vmatpush1.msra.mxu0 0.0
          %856 = vmatprep.subr.mxu0 0.0
          %857 = vmatpush1.msra.mxu0 0.0
          %858 = vmatprep.subr.mxu0 0.0
          %859 = vmatpush1.msra.mxu0 0.0
          %860 = vmatprep.subr.mxu0 0.0
          %861 = vmatpush1.msra.mxu0 0.0
          %862 = vmatprep.subr.mxu0 0.0
          %863 = vmatpush1.msra.mxu0 0.0
          %864 = vmatprep.subr.mxu0 0.0
          %865 = vmatpush1.msra.mxu0 0.0
          %866 = vmatprep.subr.mxu0 0.0
          %867 = vmatpush1.msra.mxu0 0.0
          %868 = vmatprep.subr.mxu0 %v803
          %869 = vmatpush1.msra.mxu0 %v802
          %870 = vmatprep.subr.mxu0 %v801
          %871 = vmatpush1.msra.mxu0 %v800
          %872 = vmatprep.subr.mxu0 %v799
          %873 = vmatpush1.msra.mxu0 %v798
          %874 = vmatprep.subr.mxu0 %v797
          %875 = vmatpush1.msra.mxu0 %v796
          %876 = vmatprep.subr.mxu0 0.0
          %877 = vmatpush2.msra.mxu0 0.0
          %878 = vmatprep.subr.mxu0 0.0
          %879 = vmatpush2.msra.mxu0 0.0
          %880 = vmatprep.subr.mxu0 0.0
          %881 = vmatpush2.msra.mxu0 0.0
          %882 = vmatprep.subr.mxu0 0.0
          %883 = vmatpush2.msra.mxu0 0.0
          %884 = vmatprep.subr.mxu0 0.0
          %885 = vmatpush2.msra.mxu0 0.0
          %886 = vmatprep.subr.mxu0 0.0
          %887 = vmatpush2.msra.mxu0 0.0
          %888 = vmatprep.subr.mxu0 0.0
          %889 = vmatpush2.msra.mxu0 0.0
          %890 = vmatprep.subr.mxu0 0.0
          %891 = vmatpush2.msra.mxu0 0.0
          %892 = vmatprep.subr.mxu0 0.0
          %893 = vmatpush2.msra.mxu0 0.0
          %894 = vmatprep.subr.mxu0 0.0
          %895 = vmatpush2.msra.mxu0 0.0
          %896 = vmatprep.subr.mxu0 0.0
          %897 = vmatpush2.msra.mxu0 0.0
          %898 = vmatprep.subr.mxu0 0.0
          %899 = vmatpush2.msra.mxu0 0.0
          %900 = vmatprep.subr.mxu0 0.0
          %901 = vmatpush2.msra.mxu0 0.0
          %902 = vmatprep.subr.mxu0 0.0
          %903 = vmatpush2.msra.mxu0 0.0
          %904 = vmatprep.subr.mxu0 0.0
          %905 = vmatpush2.msra.mxu0 0.0
          %906 = vmatprep.subr.mxu0 0.0
          %907 = vmatpush2.msra.mxu0 0.0
          %908 = vmatprep.mubr.f32.mxu0 0.0
          %909 = vmatmul.mubr.f32.gmra.mxu0 %v833
          %v910 = vpop.f32.mrf.mxu0
          %v911 = vadd.f32 %v815, %v910
          %v912 = vpop.f32.mrf.mxu0
          %v913 = vadd.f32 %v815, %v912
          %914 = vmatprep.mubr.f32.mxu0 0.0
          %915 = vmatmul.mubr.f32.gmra.mxu0 %v836
          %v916 = vpop.f32.mrf.mxu0
          %v917 = vadd.f32 %v820, %v916
          %v918 = vpop.f32.mrf.mxu0
          %v919 = vadd.f32 %v820, %v918
          %920 = vmatprep.mubr.f32.mxu0 0.0
          %921 = vmatmul.mubr.f32.gmra.mxu0 %v839
          %v922 = vpop.f32.mrf.mxu0
          %v923 = vadd.f32 %v825, %v922
          %v924 = vpop.f32.mrf.mxu0
          %v925 = vadd.f32 %v825, %v924
          %926 = vmatprep.mubr.f32.mxu0 0.0
          %927 = vmatmul.mubr.f32.gmra.mxu0 %v842
          %v928 = vpop.f32.mrf.mxu0
          %v929 = vadd.f32 %v830, %v928
          %v930 = vpop.f32.mrf.mxu0
          %v931 = vadd.f32 %v830, %v930
          %932 = vdwg.mxu0
          %v933 = vtanh.pop %v911
          %v934 = vtanh.pop %v913
          %v935 = vtanh.pop %v917
          %v936 = vtanh.pop %v919
          %v937 = vtanh.pop %v923
          %v938 = vtanh.pop %v925
          %v939 = vtanh.pop %v929
          %v940 = vtanh.pop %v931
          %v941 = vld [vmem:[%s5] sm:$0xff]
          %v942 = vld [vmem:[%s9] sm:$0xff]
          %944 = vset.pattern.permute.xlu0 0
          %945 = vperm.xlu0 %944, %v942
          %v946 = vpop.permute.xlu0 %945
          %v949 = vsel %vm694, %v941, 0
          %951 = vmatprep.subr.mxu0 0.0
          %952 = vmatpush1.msra.mxu0 0.0
          %953 = vmatprep.subr.mxu0 0.0
          %954 = vmatpush1.msra.mxu0 0.0
          %955 = vmatprep.subr.mxu0 0.0
          %956 = vmatpush1.msra.mxu0 0.0
          %957 = vmatprep.subr.mxu0 0.0
          %958 = vmatpush1.msra.mxu0 0.0
          %959 = vmatprep.subr.mxu0 0.0
          %960 = vmatpush1.msra.mxu0 0.0
          %961 = vmatprep.subr.mxu0 0.0
          %962 = vmatpush1.msra.mxu0 0.0
          %963 = vmatprep.subr.mxu0 0.0
          %964 = vmatpush1.msra.mxu0 0.0
          %965 = vmatprep.subr.mxu0 0.0
          %966 = vmatpush1.msra.mxu0 0.0
          %967 = vmatprep.subr.mxu0 0.0
          %968 = vmatpush1.msra.mxu0 0.0
          %969 = vmatprep.subr.mxu0 0.0
          %970 = vmatpush1.msra.mxu0 0.0
          %971 = vmatprep.subr.mxu0 0.0
          %972 = vmatpush1.msra.mxu0 0.0
          %973 = vmatprep.subr.mxu0 0.0
          %974 = vmatpush1.msra.mxu0 0.0
          %975 = vmatprep.subr.mxu0 %v940
          %976 = vmatpush1.msra.mxu0 %v939
          %977 = vmatprep.subr.mxu0 %v938
          %978 = vmatpush1.msra.mxu0 %v937
          %979 = vmatprep.subr.mxu0 %v936
          %980 = vmatpush1.msra.mxu0 %v935
          %981 = vmatprep.subr.mxu0 %v934
          %982 = vmatpush1.msra.mxu0 %v933
          %983 = vmatprep.subr.mxu0 0.0
          %984 = vmatpush2.msra.mxu0 0.0
          %985 = vmatprep.subr.mxu0 0.0
          %986 = vmatpush2.msra.mxu0 0.0
          %987 = vmatprep.subr.mxu0 0.0
          %988 = vmatpush2.msra.mxu0 0.0
          %989 = vmatprep.subr.mxu0 0.0
          %990 = vmatpush2.msra.mxu0 0.0
          %991 = vmatprep.subr.mxu0 0.0
          %992 = vmatpush2.msra.mxu0 0.0
          %993 = vmatprep.subr.mxu0 0.0
          %994 = vmatpush2.msra.mxu0 0.0
          %995 = vmatprep.subr.mxu0 0.0
          %996 = vmatpush2.msra.mxu0 0.0
          %997 = vmatprep.subr.mxu0 0.0
          %998 = vmatpush2.msra.mxu0 0.0
          %999 = vmatprep.subr.mxu0 0.0
          %1000 = vmatpush2.msra.mxu0 0.0
          %1001 = vmatprep.subr.mxu0 0.0
          %1002 = vmatpush2.msra.mxu0 0.0
          %1003 = vmatprep.subr.mxu0 0.0
          %1004 = vmatpush2.msra.mxu0 0.0
          %1005 = vmatprep.subr.mxu0 0.0
          %1006 = vmatpush2.msra.mxu0 0.0
          %1007 = vmatprep.subr.mxu0 0.0
          %1008 = vmatpush2.msra.mxu0 0.0
          %1009 = vmatprep.subr.mxu0 0.0
          %1010 = vmatpush2.msra.mxu0 0.0
          %1011 = vmatprep.subr.mxu0 0.0
          %1012 = vmatpush2.msra.mxu0 0.0
          %1013 = vmatprep.subr.mxu0 0.0
          %1014 = vmatpush2.msra.mxu0 0.0
          %1015 = vmatprep.mubr.f32.mxu0 0.0
          %1016 = vmatmul.mubr.f32.gmra.mxu0 %v949
          %v1017 = vpop.f32.mrf.mxu0
          %v1018 = vadd.f32 %v946, %v1017
          %v1019 = vpop.f32.mrf.mxu0
          %v1020 = vadd.f32 %v946, %v1019
          %1021 = vdwg.mxu0
          %1022 = vst [vmem:[%s558] sm:$0xff] %v1018
          %1023 = vst [vmem:[%s558 + $0x8] sm:$0xff] %v1020
        $region88: #{tpu_custom_call.1} parent=83 // pred_fallthru
          _
        %v1024 = vld [vmem:[%s574] sm:$0x3]
        %v1025 = vld [vmem:[%s10] sm:$0xff]
        %1027 = vset.pattern.permute.xlu0 0
        %1028 = vperm.xlu0 %1027, %v1025
        %v1029 = vpop.permute.xlu0 %1028
        %v1032 = vlaneseq
        %v1033 = vshrl.u32 %v1032, 7
        %v1034 = vsub.s32 0, %v1033
        %v1035 = vrot.slane %v1024, %v1034
        %v1036 = vlaneseq
        %v1037 = vshrl.u32 %v1036, 7
        %v1038 = vsub.s32 1, %v1037
        %v1039 = vrot.slane %v1024, %v1038
        %v1042 = vmul.f32 %v1029, %v1035
        %v1043 = vmul.f32 %v1029, %v1039
        %v1044 = vld [vmem:[%s13] sm:$0xff]
        %1046 = vset.pattern.permute.xlu0 0
        %1047 = vperm.xlu0 %1046, %v1044
        %v1048 = vpop.permute.xlu0 %1047
        %v1050 = vadd.f32 %v1042, %v1048
        %v1051 = vadd.f32 %v1043, %v1048
        %v1052 = vtanh.pop %v1050
        %v1053 = vtanh.pop %v1051
        %v1054 = vld [vmem:[%s11] sm:$0xff]
        %v1055 = vld [vmem:[%s14] sm:$0xff]
        %1057 = vset.pattern.permute.xlu0 0
        %1058 = vperm.xlu0 %1057, %v1055
        %v1059 = vpop.permute.xlu0 %1058
        %vm1061 = vcmask 64512
        %v1063 = vsel %vm1061, %v1054, 0
        %1065 = vmatprep.subr.mxu0 0.0
        %1066 = vmatpush1.msra.mxu0 0.0
        %1067 = vmatprep.subr.mxu0 0.0
        %1068 = vmatpush1.msra.mxu0 0.0
        %1069 = vmatprep.subr.mxu0 0.0
        %1070 = vmatpush1.msra.mxu0 0.0
        %1071 = vmatprep.subr.mxu0 0.0
        %1072 = vmatpush1.msra.mxu0 0.0
        %1073 = vmatprep.subr.mxu0 0.0
        %1074 = vmatpush1.msra.mxu0 0.0
        %1075 = vmatprep.subr.mxu0 0.0
        %1076 = vmatpush1.msra.mxu0 0.0
        %1077 = vmatprep.subr.mxu0 0.0
        %1078 = vmatpush1.msra.mxu0 0.0
        %1079 = vmatprep.subr.mxu0 0.0
        %1080 = vmatpush1.msra.mxu0 0.0
        %1081 = vmatprep.subr.mxu0 0.0
        %1082 = vmatpush1.msra.mxu0 0.0
        %1083 = vmatprep.subr.mxu0 0.0
        %1084 = vmatpush1.msra.mxu0 0.0
        %1085 = vmatprep.subr.mxu0 0.0
        %1086 = vmatpush1.msra.mxu0 0.0
        %1087 = vmatprep.subr.mxu0 0.0
        %1088 = vmatpush1.msra.mxu0 0.0
        %1089 = vmatprep.subr.mxu0 0.0
        %1090 = vmatpush1.msra.mxu0 0.0
        %1091 = vmatprep.subr.mxu0 0.0
        %1092 = vmatpush1.msra.mxu0 0.0
        %1093 = vmatprep.subr.mxu0 0.0
        %1094 = vmatpush1.msra.mxu0 0.0
        %1095 = vmatprep.subr.mxu0 %v1053
        %1096 = vmatpush1.msra.mxu0 %v1052
        %1097 = vmatprep.subr.mxu0 0.0
        %1098 = vmatpush2.msra.mxu0 0.0
        %1099 = vmatprep.subr.mxu0 0.0
        %1100 = vmatpush2.msra.mxu0 0.0
        %1101 = vmatprep.subr.mxu0 0.0
        %1102 = vmatpush2.msra.mxu0 0.0
        %1103 = vmatprep.subr.mxu0 0.0
        %1104 = vmatpush2.msra.mxu0 0.0
        %1105 = vmatprep.subr.mxu0 0.0
        %1106 = vmatpush2.msra.mxu0 0.0
        %1107 = vmatprep.subr.mxu0 0.0
        %1108 = vmatpush2.msra.mxu0 0.0
        %1109 = vmatprep.subr.mxu0 0.0
        %1110 = vmatpush2.msra.mxu0 0.0
        %1111 = vmatprep.subr.mxu0 0.0
        %1112 = vmatpush2.msra.mxu0 0.0
        %1113 = vmatprep.subr.mxu0 0.0
        %1114 = vmatpush2.msra.mxu0 0.0
        %1115 = vmatprep.subr.mxu0 0.0
        %1116 = vmatpush2.msra.mxu0 0.0
        %1117 = vmatprep.subr.mxu0 0.0
        %1118 = vmatpush2.msra.mxu0 0.0
        %1119 = vmatprep.subr.mxu0 0.0
        %1120 = vmatpush2.msra.mxu0 0.0
        %1121 = vmatprep.subr.mxu0 0.0
        %1122 = vmatpush2.msra.mxu0 0.0
        %1123 = vmatprep.subr.mxu0 0.0
        %1124 = vmatpush2.msra.mxu0 0.0
        %1125 = vmatprep.subr.mxu0 0.0
        %1126 = vmatpush2.msra.mxu0 0.0
        %1127 = vmatprep.subr.mxu0 0.0
        %1128 = vmatpush2.msra.mxu0 0.0
        %1129 = vmatprep.mubr.f32.mxu0 0.0
        %1130 = vmatmul.mubr.f32.gmra.mxu0 %v1063
        %v1131 = vpop.f32.mrf.mxu0
        %v1132 = vadd.f32 %v1059, %v1131
        %v1133 = vpop.f32.mrf.mxu0
        %v1134 = vadd.f32 %v1059, %v1133
        %1135 = vdwg.mxu0
        %v1136 = vtanh.pop %v1132
        %v1137 = vtanh.pop %v1134
        %v1138 = vld [vmem:[%s12] sm:$0xf]
        %v1139 = vld [vmem:[%s15] sm:$0xf]
        %1141 = vset.pattern.permute.xlu0 0
        %1142 = vperm.xlu0 %1141, %v1139
        %v1143 = vpop.permute.xlu0 %1142
        %v1146 = vsel %vm1061, %v1138, 0
        %1148 = vmatprep.subr.mxu0 0.0
        %1149 = vmatpush1.msra.mxu0 0.0
        %1150 = vmatprep.subr.mxu0 0.0
        %1151 = vmatpush1.msra.mxu0 0.0
        %1152 = vmatprep.subr.mxu0 0.0
        %1153 = vmatpush1.msra.mxu0 0.0
        %1154 = vmatprep.subr.mxu0 0.0
        %1155 = vmatpush1.msra.mxu0 0.0
        %1156 = vmatprep.subr.mxu0 0.0
        %1157 = vmatpush1.msra.mxu0 0.0
        %1158 = vmatprep.subr.mxu0 0.0
        %1159 = vmatpush1.msra.mxu0 0.0
        %1160 = vmatprep.subr.mxu0 0.0
        %1161 = vmatpush1.msra.mxu0 0.0
        %1162 = vmatprep.subr.mxu0 0.0
        %1163 = vmatpush1.msra.mxu0 0.0
        %1164 = vmatprep.subr.mxu0 0.0
        %1165 = vmatpush1.msra.mxu0 0.0
        %1166 = vmatprep.subr.mxu0 0.0
        %1167 = vmatpush1.msra.mxu0 0.0
        %1168 = vmatprep.subr.mxu0 0.0
        %1169 = vmatpush1.msra.mxu0 0.0
        %1170 = vmatprep.subr.mxu0 0.0
        %1171 = vmatpush1.msra.mxu0 0.0
        %1172 = vmatprep.subr.mxu0 0.0
        %1173 = vmatpush1.msra.mxu0 0.0
        %1174 = vmatprep.subr.mxu0 0.0
        %1175 = vmatpush1.msra.mxu0 0.0
        %1176 = vmatprep.subr.mxu0 0.0
        %1177 = vmatpush1.msra.mxu0 0.0
        %1178 = vmatprep.subr.mxu0 %v1137
        %1179 = vmatpush1.msra.mxu0 %v1136
        %1180 = vmatprep.subr.mxu0 0.0
        %1181 = vmatpush2.msra.mxu0 0.0
        %1182 = vmatprep.subr.mxu0 0.0
        %1183 = vmatpush2.msra.mxu0 0.0
        %1184 = vmatprep.subr.mxu0 0.0
        %1185 = vmatpush2.msra.mxu0 0.0
        %1186 = vmatprep.subr.mxu0 0.0
        %1187 = vmatpush2.msra.mxu0 0.0
        %1188 = vmatprep.subr.mxu0 0.0
        %1189 = vmatpush2.msra.mxu0 0.0
        %1190 = vmatprep.subr.mxu0 0.0
        %1191 = vmatpush2.msra.mxu0 0.0
        %1192 = vmatprep.subr.mxu0 0.0
        %1193 = vmatpush2.msra.mxu0 0.0
        %1194 = vmatprep.subr.mxu0 0.0
        %1195 = vmatpush2.msra.mxu0 0.0
        %1196 = vmatprep.subr.mxu0 0.0
        %1197 = vmatpush2.msra.mxu0 0.0
        %1198 = vmatprep.subr.mxu0 0.0
        %1199 = vmatpush2.msra.mxu0 0.0
        %1200 = vmatprep.subr.mxu0 0.0
        %1201 = vmatpush2.msra.mxu0 0.0
        %1202 = vmatprep.subr.mxu0 0.0
        %1203 = vmatpush2.msra.mxu0 0.0
        %1204 = vmatprep.subr.mxu0 0.0
        %1205 = vmatpush2.msra.mxu0 0.0
        %1206 = vmatprep.subr.mxu0 0.0
        %1207 = vmatpush2.msra.mxu0 0.0
        %1208 = vmatprep.subr.mxu0 0.0
        %1209 = vmatpush2.msra.mxu0 0.0
        %1210 = vmatprep.subr.mxu0 0.0
        %1211 = vmatpush2.msra.mxu0 0.0
        %1212 = vmatprep.mubr.f32.mxu0 0.0
        %1213 = vmatmul.mubr.f32.gmra.mxu0 %v1146
        %v1214 = vpop.f32.mrf.mxu0
        %v1215 = vadd.f32 %v1143, %v1214
        %v1216 = vpop.f32.mrf.mxu0
        %v1217 = vadd.f32 %v1143, %v1216
        %1218 = vdwg.mxu0
        %v1221 = vcombine.low %v1215, %v1217
        %1223 = vst [vmem:[%s565] sm:$0xff] %v1221
        %s1224 = sand.u32 %s389, 1
        %s1225 = scalar_lea.sflag [#allocation3], %s1224
        %s1226 = sand.u32 %s389, 1
        %s1227 = smul.addr %s1226, 16
        %s1228 = scalar_lea.vmem [#allocation2], %s1227
        %s1229 = sand.u32 %s415, 1
        %s1230 = scalar_lea.sflag [#allocation5], %s1229
        %s1231 = sand.u32 %s415, 1
        %s1232 = smul.addr %s1231, 8
        %s1233 = scalar_lea.vmem [#allocation4], %s1232
        // Predicated region
        $region89: #{tpu_custom_call.1} parent=83 // pred_check
          %p1234 = pneg %p399
        $region90: #{tpu_custom_call.1} parent=83 // pred_check_branch
          %1236 = sbr.rel (%p1234) target = $region92
        $region91: #{tpu_custom_call.1} parent=83 // pred_region
          %s1237 = smul.u32 2, %s35
          %s1239 = ssub.s32 256, 256
          %1240 = vsyncadd %s1225, %s1239
          %s1241 = smul.addr %s1237, 128
          %s1242 = scalar_lea.hbm %s16, %s1241
          %s1244 = sshll.u32 %s1228, 4
          %s1245 = int_to_ptr.vmem [resolvable:$true] %s1244
          %1247 = dma.vmem_to_hbm [thread:$0]  %s1245, 256, %s1242, %s1225
        $region92: #{tpu_custom_call.1} parent=83 // pred_fallthru
          _
        // Predicated region
        $region93: #{tpu_custom_call.1} parent=83 // pred_check
          %p1248 = pneg %p425
        $region94: #{tpu_custom_call.1} parent=83 // pred_check_branch
          %1250 = sbr.rel (%p1248) target = $region96
        $region95: #{tpu_custom_call.1} parent=83 // pred_region
          %s1251 = smul.u32 2, %s35
          %s1253 = ssub.s32 128, 128
          %1254 = vsyncadd %s1230, %s1253
          %s1255 = smul.addr %s1251, 64
          %s1256 = scalar_lea.hbm %s17, %s1255
          %s1258 = sshll.u32 %s1233, 4
          %s1259 = int_to_ptr.vmem [resolvable:$true] %s1258
          %1261 = dma.vmem_to_hbm [thread:$0]  %s1259, 128, %s1256, %s1230
        $region96: #{tpu_custom_call.1} parent=83 // pred_fallthru
          _
      $region84: #{tpu_custom_call.1} parent=5 // pred_fallthru
        _
      %p1262 = scmp.le.s32.totalorder 2, %s30
      // Predicated region
      $region97: #{tpu_custom_call.1} parent=5 // pred_check
        %p1263 = pneg %p1262
      $region98: #{tpu_custom_call.1} parent=5 // pred_check_branch
        %1265 = sbr.rel (%p1263) target = $region100
      $region99: #{tpu_custom_call.1} parent=5 // pred_region
        %s1266 = ssub.s32 %s30, 2
        // Predicated region
        $region101: #{tpu_custom_call.1} parent=99 // pred_check
          %p1267 = pneg %p405
        $region102: #{tpu_custom_call.1} parent=99 // pred_check_branch
          %1269 = sbr.rel (%p1267) target = $region104
        $region103: #{tpu_custom_call.1} parent=99 // pred_region
          %s1270 = sand.u32 %s390, 1
          %s1271 = scalar_lea.sflag [#allocation3], %s1270
          %s1272 = sand.u32 %s390, 1
          %s1273 = smul.addr %s1272, 16
          %s1274 = scalar_lea.vmem [#allocation2], %s1273
          %1275 = dma.done %s1271, 256
        $region104: #{tpu_custom_call.1} parent=99 // pred_fallthru
          _
        // Predicated region
        $region105: #{tpu_custom_call.1} parent=99 // pred_check
          %p1276 = pneg %p431
        $region106: #{tpu_custom_call.1} parent=99 // pred_check_branch
          %1278 = sbr.rel (%p1276) target = $region108
        $region107: #{tpu_custom_call.1} parent=99 // pred_region
          %s1279 = sand.u32 %s416, 1
          %s1280 = scalar_lea.sflag [#allocation5], %s1279
          %s1281 = sand.u32 %s416, 1
          %s1282 = smul.addr %s1281, 8
          %s1283 = scalar_lea.vmem [#allocation4], %s1282
          %1284 = dma.done %s1280, 128
        $region108: #{tpu_custom_call.1} parent=99 // pred_fallthru
          _
      $region100: #{tpu_custom_call.1} parent=5 // pred_fallthru
        _
    $region6: #{tpu_custom_call.1} parent=1 // loop_footer
      %s34 = sadd.s32 1, %s30
    $region7: #{tpu_custom_call.1} parent=1 // loop_footer_branch
      %29 = sbr.rel target = $region3
    $region8: #{tpu_custom_call.1} parent=1 // loop_exit
      _
    %1285 = vsyncpa [#allocation3], 1
    %s1286 = scalar_lea.sflag [#allocation3], 1
    %1287 = vsyncpa %s1286, 1
    %1288 = vsyncpa [#allocation5], 1
    %s1289 = scalar_lea.sflag [#allocation5], 1
    %1290 = vsyncpa %s1289, 1

</llo_original>
